<compile_context>
chip_gen: v7x
topology: tpu7x:2x2x1
jax: 0.10.0
libtpu: 0.0.40
codegen_flags: <defaults>
</compile_context>

<pallas_src>
import jax
import jax.numpy as jnp
from jax import lax
from jax.experimental import pallas as pl
from jax.experimental.pallas import tpu as pltpu


def _f32(v):
    return v if v.dtype == jnp.float32 else v.astype(jnp.float32)


def _make_lstm_kernel(num_layers, hidden_size, seq_len):
    H = hidden_size
    T = seq_len
    L = num_layers

    def kernel(*refs):
        x_ref = refs[0]                            # (T, B, I)
        w_ih_refs = refs[1:1 + L]                  # each (in_dim, 4H), g-cols x2
        w_hh_refs = refs[1 + L:1 + 2 * L]          # each (H, 4H),      g-cols x2
        b_refs = refs[1 + 2 * L:1 + 3 * L]         # each (1, 4H),      g-cols x2
        out_ref, hN_ref, cN_ref, act_ref = refs[1 + 3 * L:]

        B = x_ref.shape[1]

        for layer in range(L):                     # static layer loop
            last = layer == L - 1

            # ---- Hoisted input projection: one MXU matmul at M = T*B ----
            if layer == 0:
                xin = _f32(x_ref[...])             # (T, B, I)
            else:
                xin = act_ref[...]                 # (T, B, H) f32
            k_in = xin.shape[-1]
            xin2d = xin.reshape(T * B, k_in)

            w_ih = _f32(w_ih_refs[layer][...])     # (k_in, 4H)
            w_hh = _f32(w_hh_refs[layer][...])     # (H, 4H) — reused all T steps
            bias = _f32(b_refs[layer][...])        # (1, 4H)

            xproj = jnp.dot(xin2d, w_ih,
                            preferred_element_type=jnp.float32) + bias  # (T*B, 4H)

            # ---- Serial recurrence: only h @ W_hh on the critical path ----
            h = jnp.zeros((B, H), jnp.float32)
            c = jnp.zeros((B, H), jnp.float32)
            for t in range(T):                     # static unroll (T small)
                z = xproj[t * B:(t + 1) * B, :] + jnp.dot(
                    h, w_hh, preferred_element_type=jnp.float32)   # (B, 4H)
                s = jax.nn.sigmoid(z)              # one full-lane EUP activation
                i_g = s[:, 0 * H:1 * H]
                f_g = s[:, 1 * H:2 * H]
                g_g = 2.0 * s[:, 2 * H:3 * H] - 1.0   # == tanh(z_g); g-cols pre-scaled x2
                o_g = s[:, 3 * H:4 * H]
                c = f_g * c + i_g * g_g
                h = o_g * jnp.tanh(c)
                if last:
                    out_ref[t] = h.astype(out_ref.dtype)
                else:
                    act_ref[t] = h

            hN_ref[layer] = h.astype(hN_ref.dtype)
            cN_ref[layer] = c.astype(cN_ref.dtype)

    return kernel


def _vmem_spec():
    return pl.BlockSpec(memory_space=pltpu.MemorySpace.VMEM)


def rnn_forward(x, packed_params, hidden_size):
    """Equivalent of RNN.forward (arch='lstm'): returns (output, (h_n, c_n)).

    x: (T, B, input_size)   output: (T, B, H)
    h_n, c_n: (num_layers, B, H)
    packed_params: output of pack_lstm_params().
    """
    T, B, _ = x.shape
    H = hidden_size
    L = len(packed_params)
    kernel = _make_lstm_kernel(L, H, T)

    flat_args = ([p["w_ih"] for p in packed_params]
                 + [p["w_hh"] for p in packed_params]
                 + [p["bias"] for p in packed_params])

    out, h_n, c_n = pl.pallas_call(
        kernel,
        out_shape=(
            jax.ShapeDtypeStruct((T, B, H), x.dtype),
            jax.ShapeDtypeStruct((L, B, H), x.dtype),
            jax.ShapeDtypeStruct((L, B, H), x.dtype),
        ),
        in_specs=[_vmem_spec() for _ in range(1 + 3 * L)],
        out_specs=(_vmem_spec(), _vmem_spec(), _vmem_spec()),
        scratch_shapes=[pltpu.VMEM((T, B, H), jnp.float32)],  # inter-layer acts
    )(x, *flat_args)
    return out, (h_n, c_n)


def init_lstm_params(key, input_size, hidden_size, num_layers,
                     dtype=jnp.float32):
    """PyTorch nn.LSTM-style parameters (natural layout, U(-1/sqrt(H), 1/sqrt(H)))."""
    k = 1.0 / float(hidden_size) ** 0.5
    params = []
    for layer in range(num_layers):
        in_dim = input_size if layer == 0 else hidden_size
        key, k1, k2, k3, k4 = jax.random.split(key, 5)
        params.append({
            "w_ih": jax.random.uniform(k1, (4 * hidden_size, in_dim),
                                       minval=-k, maxval=k, dtype=dtype),
            "w_hh": jax.random.uniform(k2, (4 * hidden_size, hidden_size),
                                       minval=-k, maxval=k, dtype=dtype),
            "b_ih": jax.random.uniform(k3, (4 * hidden_size,),
                                       minval=-k, maxval=k, dtype=dtype),
            "b_hh": jax.random.uniform(k4, (4 * hidden_size,),
                                       minval=-k, maxval=k, dtype=dtype),
        })
    return params


def pack_lstm_params(params, hidden_size):
    """One-time host-side packing for the kernel.

    - Transpose so in-kernel matmuls are (M, K) @ (K, 4H).
    - Pre-sum the two biases.
    - Pre-scale the g-gate (cell-candidate) columns by 2 so the kernel can
      recover tanh(z) = 2*sigmoid(2z) - 1 from one full-tile sigmoid.
    Gate column order along 4H is PyTorch's [i, f, g, o].
    """
    H = hidden_size
    scale = jnp.concatenate([jnp.ones((2 * H,), jnp.float32),
                             2.0 * jnp.ones((H,), jnp.float32),
                             jnp.ones((H,), jnp.float32)])
    packed = []
    for p in params:
        dt = p["w_ih"].dtype
        packed.append({
            "w_ih": (p["w_ih"].T.astype(jnp.float32) * scale[None, :]).astype(dt),
            "w_hh": (p["w_hh"].T.astype(jnp.float32) * scale[None, :]).astype(dt),
            "bias": (((p["b_ih"] + p["b_hh"]).astype(jnp.float32) * scale)
                     [None, :]).astype(dt),
        })
    return packed


def rnn_forward_reference(x, params, hidden_size):
    """Pure-JAX reference with exact PyTorch nn.LSTM math (natural params)."""
    H = hidden_size
    layer_in = x.astype(jnp.float32)
    h_list, c_list = [], []
    for p in params:
        w_ih = p["w_ih"].astype(jnp.float32)   # (4H, in_dim)
        w_hh = p["w_hh"].astype(jnp.float32)   # (4H, H)
        b = (p["b_ih"] + p["b_hh"]).astype(jnp.float32)
        T, B, _ = layer_in.shape
        h = jnp.zeros((B, H), jnp.float32)
        c = jnp.zeros((B, H), jnp.float32)
        outs = []
        for t in range(T):
            gates = (jnp.dot(layer_in[t], w_ih.T, precision=lax.Precision.HIGHEST)
                     + jnp.dot(h, w_hh.T, precision=lax.Precision.HIGHEST) + b)
            i_g = jax.nn.sigmoid(gates[:, 0 * H:1 * H])
            f_g = jax.nn.sigmoid(gates[:, 1 * H:2 * H])
            g_g = jnp.tanh(gates[:, 2 * H:3 * H])
            o_g = jax.nn.sigmoid(gates[:, 3 * H:4 * H])
            c = f_g * c + i_g * g_g
            h = o_g * jnp.tanh(c)
            outs.append(h)
        layer_in = jnp.stack(outs, axis=0)
        h_list.append(h)
        c_list.append(c)
    return layer_in, (jnp.stack(h_list, axis=0), jnp.stack(c_list, axis=0))


if __name__ == "__main__":
    # Mirrors arch_args = dict(input_size=16, hidden_size=32, num_layers=2)
    INPUT_SIZE = 16
    HIDDEN_SIZE = 32
    NUM_LAYERS = 2
    T, B = 8, 2

    key = jax.random.PRNGKey(0)
    key_x, key_p = jax.random.split(key)
    x = jax.random.normal(key_x, (T, B, INPUT_SIZE), dtype=jnp.float32)

    params = init_lstm_params(key_p, INPUT_SIZE, HIDDEN_SIZE, NUM_LAYERS)
    packed = pack_lstm_params(params, HIDDEN_SIZE)

    output, (h_n, c_n) = rnn_forward(x, packed, HIDDEN_SIZE)
    jax.block_until_ready((output, h_n, c_n))

    assert output.shape == (T, B, HIDDEN_SIZE)
    assert h_n.shape == (NUM_LAYERS, B, HIDDEN_SIZE)
    assert c_n.shape == (NUM_LAYERS, B, HIDDEN_SIZE)

    # Numerical check against exact PyTorch-semantics reference.
    ref_out, (ref_h, ref_c) = rnn_forward_reference(x, params, HIDDEN_SIZE)
    assert jnp.allclose(output, ref_out, atol=1e-3, rtol=1e-3)
    assert jnp.allclose(h_n, ref_h, atol=1e-3, rtol=1e-3)
    assert jnp.allclose(c_n, ref_c, atol=1e-3, rtol=1e-3)

    print("KERNEL_OK")
</pallas_src>

<mosaic_0001>
module attributes {stable_mosaic.version = 11 : i64} {
  func.func @kernel(%arg0: memref<8x2x16xf32, #tpu.memory_space<vmem>>, %arg1: memref<16x128xf32, #tpu.memory_space<vmem>>, %arg2: memref<32x128xf32, #tpu.memory_space<vmem>>, %arg3: memref<32x128xf32, #tpu.memory_space<vmem>>, %arg4: memref<32x128xf32, #tpu.memory_space<vmem>>, %arg5: memref<1x128xf32, #tpu.memory_space<vmem>>, %arg6: memref<1x128xf32, #tpu.memory_space<vmem>>, %arg7: memref<8x2x32xf32, #tpu.memory_space<vmem>>, %arg8: memref<2x2x32xf32, #tpu.memory_space<vmem>>, %arg9: memref<2x2x32xf32, #tpu.memory_space<vmem>>, %arg10: memref<8x2x32xf32, #tpu.memory_space<vmem>>) attributes {dimension_semantics = [], scalar_prefetch = 0 : i64, scratch_operands = 1 : i64, tpu.core_type = #tpu.core_type<tc>} {
    %c0 = arith.constant 0 : index
    %c0_0 = arith.constant 0 : index
    %c0_1 = arith.constant 0 : index
    %0 = vector.load %arg0[%c0, %c0_0, %c0_1] : memref<8x2x16xf32, #tpu.memory_space<vmem>>, vector<8x2x16xf32>
    %1 = vector.shape_cast %0 : vector<8x2x16xf32> to vector<16x16xf32>
    %c0_2 = arith.constant 0 : index
    %c0_3 = arith.constant 0 : index
    %2 = vector.load %arg1[%c0_2, %c0_3] : memref<16x128xf32, #tpu.memory_space<vmem>>, vector<16x128xf32>
    %c0_4 = arith.constant 0 : index
    %c0_5 = arith.constant 0 : index
    %3 = vector.load %arg3[%c0_4, %c0_5] : memref<32x128xf32, #tpu.memory_space<vmem>>, vector<32x128xf32>
    %c0_6 = arith.constant 0 : index
    %c0_7 = arith.constant 0 : index
    %4 = vector.load %arg5[%c0_6, %c0_7] : memref<1x128xf32, #tpu.memory_space<vmem>>, vector<1x128xf32>
    %cst = arith.constant dense<0.000000e+00> : vector<16x128xf32>
    %5 = tpu.matmul %1, %2, %cst {dimension_numbers = #tpu.dot_dimension_numbers<[1], [0], [0], [1], [0, 0, 1, 1], [], []>} : vector<16x16xf32>, vector<16x128xf32>, vector<16x128xf32> -> vector<16x128xf32>
    %6 = vector.broadcast %4 : vector<1x128xf32> to vector<16x128xf32>
    %7 = arith.addf %5, %6 : vector<16x128xf32>
    %cst_8 = arith.constant 0.000000e+00 : f32
    %8 = vector.broadcast %cst_8 : f32 to vector<2x32xf32>
    %cst_9 = arith.constant 0.000000e+00 : f32
    %9 = vector.broadcast %cst_9 : f32 to vector<2x32xf32>
    %10 = vector.extract_strided_slice %7 {offsets = [0, 0], sizes = [2, 128], strides = [1, 1]} : vector<16x128xf32> to vector<2x128xf32>
    %cst_10 = arith.constant dense<0.000000e+00> : vector<2x128xf32>
    %11 = tpu.matmul %8, %3, %cst_10 {dimension_numbers = #tpu.dot_dimension_numbers<[1], [0], [0], [1], [0, 0, 1, 1], [], []>} : vector<2x32xf32>, vector<32x128xf32>, vector<2x128xf32> -> vector<2x128xf32>
    %12 = arith.addf %10, %11 : vector<2x128xf32>
    %13 = arith.negf %12 : vector<2x128xf32>
    %14 = math.exp %13 : vector<2x128xf32>
    %cst_11 = arith.constant 1.000000e+00 : f32
    %15 = vector.broadcast %cst_11 : f32 to vector<2x128xf32>
    %16 = arith.addf %15, %14 : vector<2x128xf32>
    %17 = arith.divf %15, %16 : vector<2x128xf32>
    %18 = vector.extract_strided_slice %17 {offsets = [0, 0], sizes = [2, 32], strides = [1, 1]} : vector<2x128xf32> to vector<2x32xf32>
    %19 = vector.extract_strided_slice %17 {offsets = [0, 32], sizes = [2, 32], strides = [1, 1]} : vector<2x128xf32> to vector<2x32xf32>
    %20 = vector.extract_strided_slice %17 {offsets = [0, 64], sizes = [2, 32], strides = [1, 1]} : vector<2x128xf32> to vector<2x32xf32>
    %cst_12 = arith.constant 2.000000e+00 : f32
    %21 = vector.broadcast %cst_12 : f32 to vector<2x32xf32>
    %22 = arith.mulf %21, %20 : vector<2x32xf32>
    %cst_13 = arith.constant 1.000000e+00 : f32
    %23 = vector.broadcast %cst_13 : f32 to vector<2x32xf32>
    %24 = arith.subf %22, %23 : vector<2x32xf32>
    %25 = vector.extract_strided_slice %17 {offsets = [0, 96], sizes = [2, 32], strides = [1, 1]} : vector<2x128xf32> to vector<2x32xf32>
    %26 = arith.mulf %19, %9 : vector<2x32xf32>
    %27 = arith.mulf %18, %24 : vector<2x32xf32>
    %28 = arith.addf %26, %27 : vector<2x32xf32>
    %29 = math.tanh %28 : vector<2x32xf32>
    %30 = arith.mulf %25, %29 : vector<2x32xf32>
    %c0_14 = arith.constant 0 : index
    %c0_15 = arith.constant 0 : index
    %c0_16 = arith.constant 0 : index
    %31 = vector.load %arg10[%c0_14, %c0_15, %c0_16] : memref<8x2x32xf32, #tpu.memory_space<vmem>>, vector<1x2x32xf32>
    %32 = vector.shape_cast %31 : vector<1x2x32xf32> to vector<2x32xf32>
    %33 = vector.shape_cast %30 : vector<2x32xf32> to vector<1x2x32xf32>
    tpu.vector_store %arg10[%c0_14, %c0_15, %c0_16], %33 {strides = array<i32>} : memref<8x2x32xf32, #tpu.memory_space<vmem>>, vector<1x2x32xf32>,
    %34 = vector.extract_strided_slice %7 {offsets = [2, 0], sizes = [2, 128], strides = [1, 1]} : vector<16x128xf32> to vector<2x128xf32>
    %cst_17 = arith.constant dense<0.000000e+00> : vector<2x128xf32>
    %35 = tpu.matmul %30, %3, %cst_17 {dimension_numbers = #tpu.dot_dimension_numbers<[1], [0], [0], [1], [0, 0, 1, 1], [], []>} : vector<2x32xf32>, vector<32x128xf32>, vector<2x128xf32> -> vector<2x128xf32>
    %36 = arith.addf %34, %35 : vector<2x128xf32>
    %37 = arith.negf %36 : vector<2x128xf32>
    %38 = math.exp %37 : vector<2x128xf32>
    %cst_18 = arith.constant 1.000000e+00 : f32
    %39 = vector.broadcast %cst_18 : f32 to vector<2x128xf32>
    %40 = arith.addf %39, %38 : vector<2x128xf32>
    %41 = arith.divf %39, %40 : vector<2x128xf32>
    %42 = vector.extract_strided_slice %41 {offsets = [0, 0], sizes = [2, 32], strides = [1, 1]} : vector<2x128xf32> to vector<2x32xf32>
    %43 = vector.extract_strided_slice %41 {offsets = [0, 32], sizes = [2, 32], strides = [1, 1]} : vector<2x128xf32> to vector<2x32xf32>
    %44 = vector.extract_strided_slice %41 {offsets = [0, 64], sizes = [2, 32], strides = [1, 1]} : vector<2x128xf32> to vector<2x32xf32>
    %cst_19 = arith.constant 2.000000e+00 : f32
    %45 = vector.broadcast %cst_19 : f32 to vector<2x32xf32>
    %46 = arith.mulf %45, %44 : vector<2x32xf32>
    %cst_20 = arith.constant 1.000000e+00 : f32
    %47 = vector.broadcast %cst_20 : f32 to vector<2x32xf32>
    %48 = arith.subf %46, %47 : vector<2x32xf32>
    %49 = vector.extract_strided_slice %41 {offsets = [0, 96], sizes = [2, 32], strides = [1, 1]} : vector<2x128xf32> to vector<2x32xf32>
    %50 = arith.mulf %43, %28 : vector<2x32xf32>
    %51 = arith.mulf %42, %48 : vector<2x32xf32>
    %52 = arith.addf %50, %51 : vector<2x32xf32>
    %53 = math.tanh %52 : vector<2x32xf32>
    %54 = arith.mulf %49, %53 : vector<2x32xf32>
    %c1 = arith.constant 1 : index
    %c0_21 = arith.constant 0 : index
    %c0_22 = arith.constant 0 : index
    %55 = vector.load %arg10[%c1, %c0_21, %c0_22] : memref<8x2x32xf32, #tpu.memory_space<vmem>>, vector<1x2x32xf32>
    %56 = vector.shape_cast %55 : vector<1x2x32xf32> to vector<2x32xf32>
    %57 = vector.shape_cast %54 : vector<2x32xf32> to vector<1x2x32xf32>
    tpu.vector_store %arg10[%c1, %c0_21, %c0_22], %57 {strides = array<i32>} : memref<8x2x32xf32, #tpu.memory_space<vmem>>, vector<1x2x32xf32>,
    %58 = vector.extract_strided_slice %7 {offsets = [4, 0], sizes = [2, 128], strides = [1, 1]} : vector<16x128xf32> to vector<2x128xf32>
    %cst_23 = arith.constant dense<0.000000e+00> : vector<2x128xf32>
    %59 = tpu.matmul %54, %3, %cst_23 {dimension_numbers = #tpu.dot_dimension_numbers<[1], [0], [0], [1], [0, 0, 1, 1], [], []>} : vector<2x32xf32>, vector<32x128xf32>, vector<2x128xf32> -> vector<2x128xf32>
    %60 = arith.addf %58, %59 : vector<2x128xf32>
    %61 = arith.negf %60 : vector<2x128xf32>
    %62 = math.exp %61 : vector<2x128xf32>
    %cst_24 = arith.constant 1.000000e+00 : f32
    %63 = vector.broadcast %cst_24 : f32 to vector<2x128xf32>
    %64 = arith.addf %63, %62 : vector<2x128xf32>
    %65 = arith.divf %63, %64 : vector<2x128xf32>
    %66 = vector.extract_strided_slice %65 {offsets = [0, 0], sizes = [2, 32], strides = [1, 1]} : vector<2x128xf32> to vector<2x32xf32>
    %67 = vector.extract_strided_slice %65 {offsets = [0, 32], sizes = [2, 32], strides = [1, 1]} : vector<2x128xf32> to vector<2x32xf32>
    %68 = vector.extract_strided_slice %65 {offsets = [0, 64], sizes = [2, 32], strides = [1, 1]} : vector<2x128xf32> to vector<2x32xf32>
    %cst_25 = arith.constant 2.000000e+00 : f32
    %69 = vector.broadcast %cst_25 : f32 to vector<2x32xf32>
    %70 = arith.mulf %69, %68 : vector<2x32xf32>
    %cst_26 = arith.constant 1.000000e+00 : f32
    %71 = vector.broadcast %cst_26 : f32 to vector<2x32xf32>
    %72 = arith.subf %70, %71 : vector<2x32xf32>
    %73 = vector.extract_strided_slice %65 {offsets = [0, 96], sizes = [2, 32], strides = [1, 1]} : vector<2x128xf32> to vector<2x32xf32>
    %74 = arith.mulf %67, %52 : vector<2x32xf32>
    %75 = arith.mulf %66, %72 : vector<2x32xf32>
    %76 = arith.addf %74, %75 : vector<2x32xf32>
    %77 = math.tanh %76 : vector<2x32xf32>
    %78 = arith.mulf %73, %77 : vector<2x32xf32>
    %c2 = arith.constant 2 : index
    %c0_27 = arith.constant 0 : index
    %c0_28 = arith.constant 0 : index
    %79 = vector.load %arg10[%c2, %c0_27, %c0_28] : memref<8x2x32xf32, #tpu.memory_space<vmem>>, vector<1x2x32xf32>
    %80 = vector.shape_cast %79 : vector<1x2x32xf32> to vector<2x32xf32>
    %81 = vector.shape_cast %78 : vector<2x32xf32> to vector<1x2x32xf32>
    tpu.vector_store %arg10[%c2, %c0_27, %c0_28], %81 {strides = array<i32>} : memref<8x2x32xf32, #tpu.memory_space<vmem>>, vector<1x2x32xf32>,
    %82 = vector.extract_strided_slice %7 {offsets = [6, 0], sizes = [2, 128], strides = [1, 1]} : vector<16x128xf32> to vector<2x128xf32>
    %cst_29 = arith.constant dense<0.000000e+00> : vector<2x128xf32>
    %83 = tpu.matmul %78, %3, %cst_29 {dimension_numbers = #tpu.dot_dimension_numbers<[1], [0], [0], [1], [0, 0, 1, 1], [], []>} : vector<2x32xf32>, vector<32x128xf32>, vector<2x128xf32> -> vector<2x128xf32>
    %84 = arith.addf %82, %83 : vector<2x128xf32>
    %85 = arith.negf %84 : vector<2x128xf32>
    %86 = math.exp %85 : vector<2x128xf32>
    %cst_30 = arith.constant 1.000000e+00 : f32
    %87 = vector.broadcast %cst_30 : f32 to vector<2x128xf32>
    %88 = arith.addf %87, %86 : vector<2x128xf32>
    %89 = arith.divf %87, %88 : vector<2x128xf32>
    %90 = vector.extract_strided_slice %89 {offsets = [0, 0], sizes = [2, 32], strides = [1, 1]} : vector<2x128xf32> to vector<2x32xf32>
    %91 = vector.extract_strided_slice %89 {offsets = [0, 32], sizes = [2, 32], strides = [1, 1]} : vector<2x128xf32> to vector<2x32xf32>
    %92 = vector.extract_strided_slice %89 {offsets = [0, 64], sizes = [2, 32], strides = [1, 1]} : vector<2x128xf32> to vector<2x32xf32>
    %cst_31 = arith.constant 2.000000e+00 : f32
    %93 = vector.broadcast %cst_31 : f32 to vector<2x32xf32>
    %94 = arith.mulf %93, %92 : vector<2x32xf32>
    %cst_32 = arith.constant 1.000000e+00 : f32
    %95 = vector.broadcast %cst_32 : f32 to vector<2x32xf32>
    %96 = arith.subf %94, %95 : vector<2x32xf32>
    %97 = vector.extract_strided_slice %89 {offsets = [0, 96], sizes = [2, 32], strides = [1, 1]} : vector<2x128xf32> to vector<2x32xf32>
    %98 = arith.mulf %91, %76 : vector<2x32xf32>
    %99 = arith.mulf %90, %96 : vector<2x32xf32>
    %100 = arith.addf %98, %99 : vector<2x32xf32>
    %101 = math.tanh %100 : vector<2x32xf32>
    %102 = arith.mulf %97, %101 : vector<2x32xf32>
    %c3 = arith.constant 3 : index
    %c0_33 = arith.constant 0 : index
    %c0_34 = arith.constant 0 : index
    %103 = vector.load %arg10[%c3, %c0_33, %c0_34] : memref<8x2x32xf32, #tpu.memory_space<vmem>>, vector<1x2x32xf32>
    %104 = vector.shape_cast %103 : vector<1x2x32xf32> to vector<2x32xf32>
    %105 = vector.shape_cast %102 : vector<2x32xf32> to vector<1x2x32xf32>
    tpu.vector_store %arg10[%c3, %c0_33, %c0_34], %105 {strides = array<i32>} : memref<8x2x32xf32, #tpu.memory_space<vmem>>, vector<1x2x32xf32>,
    %106 = vector.extract_strided_slice %7 {offsets = [8, 0], sizes = [2, 128], strides = [1, 1]} : vector<16x128xf32> to vector<2x128xf32>
    %cst_35 = arith.constant dense<0.000000e+00> : vector<2x128xf32>
    %107 = tpu.matmul %102, %3, %cst_35 {dimension_numbers = #tpu.dot_dimension_numbers<[1], [0], [0], [1], [0, 0, 1, 1], [], []>} : vector<2x32xf32>, vector<32x128xf32>, vector<2x128xf32> -> vector<2x128xf32>
    %108 = arith.addf %106, %107 : vector<2x128xf32>
    %109 = arith.negf %108 : vector<2x128xf32>
    %110 = math.exp %109 : vector<2x128xf32>
    %cst_36 = arith.constant 1.000000e+00 : f32
    %111 = vector.broadcast %cst_36 : f32 to vector<2x128xf32>
    %112 = arith.addf %111, %110 : vector<2x128xf32>
    %113 = arith.divf %111, %112 : vector<2x128xf32>
    %114 = vector.extract_strided_slice %113 {offsets = [0, 0], sizes = [2, 32], strides = [1, 1]} : vector<2x128xf32> to vector<2x32xf32>
    %115 = vector.extract_strided_slice %113 {offsets = [0, 32], sizes = [2, 32], strides = [1, 1]} : vector<2x128xf32> to vector<2x32xf32>
    %116 = vector.extract_strided_slice %113 {offsets = [0, 64], sizes = [2, 32], strides = [1, 1]} : vector<2x128xf32> to vector<2x32xf32>
    %cst_37 = arith.constant 2.000000e+00 : f32
    %117 = vector.broadcast %cst_37 : f32 to vector<2x32xf32>
    %118 = arith.mulf %117, %116 : vector<2x32xf32>
    %cst_38 = arith.constant 1.000000e+00 : f32
    %119 = vector.broadcast %cst_38 : f32 to vector<2x32xf32>
    %120 = arith.subf %118, %119 : vector<2x32xf32>
    %121 = vector.extract_strided_slice %113 {offsets = [0, 96], sizes = [2, 32], strides = [1, 1]} : vector<2x128xf32> to vector<2x32xf32>
    %122 = arith.mulf %115, %100 : vector<2x32xf32>
    %123 = arith.mulf %114, %120 : vector<2x32xf32>
    %124 = arith.addf %122, %123 : vector<2x32xf32>
    %125 = math.tanh %124 : vector<2x32xf32>
    %126 = arith.mulf %121, %125 : vector<2x32xf32>
    %c4 = arith.constant 4 : index
    %c0_39 = arith.constant 0 : index
    %c0_40 = arith.constant 0 : index
    %127 = vector.load %arg10[%c4, %c0_39, %c0_40] : memref<8x2x32xf32, #tpu.memory_space<vmem>>, vector<1x2x32xf32>
    %128 = vector.shape_cast %127 : vector<1x2x32xf32> to vector<2x32xf32>
    %129 = vector.shape_cast %126 : vector<2x32xf32> to vector<1x2x32xf32>
    tpu.vector_store %arg10[%c4, %c0_39, %c0_40], %129 {strides = array<i32>} : memref<8x2x32xf32, #tpu.memory_space<vmem>>, vector<1x2x32xf32>,
    %130 = vector.extract_strided_slice %7 {offsets = [10, 0], sizes = [2, 128], strides = [1, 1]} : vector<16x128xf32> to vector<2x128xf32>
    %cst_41 = arith.constant dense<0.000000e+00> : vector<2x128xf32>
    %131 = tpu.matmul %126, %3, %cst_41 {dimension_numbers = #tpu.dot_dimension_numbers<[1], [0], [0], [1], [0, 0, 1, 1], [], []>} : vector<2x32xf32>, vector<32x128xf32>, vector<2x128xf32> -> vector<2x128xf32>
    %132 = arith.addf %130, %131 : vector<2x128xf32>
    %133 = arith.negf %132 : vector<2x128xf32>
    %134 = math.exp %133 : vector<2x128xf32>
    %cst_42 = arith.constant 1.000000e+00 : f32
    %135 = vector.broadcast %cst_42 : f32 to vector<2x128xf32>
    %136 = arith.addf %135, %134 : vector<2x128xf32>
    %137 = arith.divf %135, %136 : vector<2x128xf32>
    %138 = vector.extract_strided_slice %137 {offsets = [0, 0], sizes = [2, 32], strides = [1, 1]} : vector<2x128xf32> to vector<2x32xf32>
    %139 = vector.extract_strided_slice %137 {offsets = [0, 32], sizes = [2, 32], strides = [1, 1]} : vector<2x128xf32> to vector<2x32xf32>
    %140 = vector.extract_strided_slice %137 {offsets = [0, 64], sizes = [2, 32], strides = [1, 1]} : vector<2x128xf32> to vector<2x32xf32>
    %cst_43 = arith.constant 2.000000e+00 : f32
    %141 = vector.broadcast %cst_43 : f32 to vector<2x32xf32>
    %142 = arith.mulf %141, %140 : vector<2x32xf32>
    %cst_44 = arith.constant 1.000000e+00 : f32
    %143 = vector.broadcast %cst_44 : f32 to vector<2x32xf32>
    %144 = arith.subf %142, %143 : vector<2x32xf32>
    %145 = vector.extract_strided_slice %137 {offsets = [0, 96], sizes = [2, 32], strides = [1, 1]} : vector<2x128xf32> to vector<2x32xf32>
    %146 = arith.mulf %139, %124 : vector<2x32xf32>
    %147 = arith.mulf %138, %144 : vector<2x32xf32>
    %148 = arith.addf %146, %147 : vector<2x32xf32>
    %149 = math.tanh %148 : vector<2x32xf32>
    %150 = arith.mulf %145, %149 : vector<2x32xf32>
    %c5 = arith.constant 5 : index
    %c0_45 = arith.constant 0 : index
    %c0_46 = arith.constant 0 : index
    %151 = vector.load %arg10[%c5, %c0_45, %c0_46] : memref<8x2x32xf32, #tpu.memory_space<vmem>>, vector<1x2x32xf32>
    %152 = vector.shape_cast %151 : vector<1x2x32xf32> to vector<2x32xf32>
    %153 = vector.shape_cast %150 : vector<2x32xf32> to vector<1x2x32xf32>
    tpu.vector_store %arg10[%c5, %c0_45, %c0_46], %153 {strides = array<i32>} : memref<8x2x32xf32, #tpu.memory_space<vmem>>, vector<1x2x32xf32>,
    %154 = vector.extract_strided_slice %7 {offsets = [12, 0], sizes = [2, 128], strides = [1, 1]} : vector<16x128xf32> to vector<2x128xf32>
    %cst_47 = arith.constant dense<0.000000e+00> : vector<2x128xf32>
    %155 = tpu.matmul %150, %3, %cst_47 {dimension_numbers = #tpu.dot_dimension_numbers<[1], [0], [0], [1], [0, 0, 1, 1], [], []>} : vector<2x32xf32>, vector<32x128xf32>, vector<2x128xf32> -> vector<2x128xf32>
    %156 = arith.addf %154, %155 : vector<2x128xf32>
    %157 = arith.negf %156 : vector<2x128xf32>
    %158 = math.exp %157 : vector<2x128xf32>
    %cst_48 = arith.constant 1.000000e+00 : f32
    %159 = vector.broadcast %cst_48 : f32 to vector<2x128xf32>
    %160 = arith.addf %159, %158 : vector<2x128xf32>
    %161 = arith.divf %159, %160 : vector<2x128xf32>
    %162 = vector.extract_strided_slice %161 {offsets = [0, 0], sizes = [2, 32], strides = [1, 1]} : vector<2x128xf32> to vector<2x32xf32>
    %163 = vector.extract_strided_slice %161 {offsets = [0, 32], sizes = [2, 32], strides = [1, 1]} : vector<2x128xf32> to vector<2x32xf32>
    %164 = vector.extract_strided_slice %161 {offsets = [0, 64], sizes = [2, 32], strides = [1, 1]} : vector<2x128xf32> to vector<2x32xf32>
    %cst_49 = arith.constant 2.000000e+00 : f32
    %165 = vector.broadcast %cst_49 : f32 to vector<2x32xf32>
    %166 = arith.mulf %165, %164 : vector<2x32xf32>
    %cst_50 = arith.constant 1.000000e+00 : f32
    %167 = vector.broadcast %cst_50 : f32 to vector<2x32xf32>
    %168 = arith.subf %166, %167 : vector<2x32xf32>
    %169 = vector.extract_strided_slice %161 {offsets = [0, 96], sizes = [2, 32], strides = [1, 1]} : vector<2x128xf32> to vector<2x32xf32>
    %170 = arith.mulf %163, %148 : vector<2x32xf32>
    %171 = arith.mulf %162, %168 : vector<2x32xf32>
    %172 = arith.addf %170, %171 : vector<2x32xf32>
    %173 = math.tanh %172 : vector<2x32xf32>
    %174 = arith.mulf %169, %173 : vector<2x32xf32>
    %c6 = arith.constant 6 : index
    %c0_51 = arith.constant 0 : index
    %c0_52 = arith.constant 0 : index
    %175 = vector.load %arg10[%c6, %c0_51, %c0_52] : memref<8x2x32xf32, #tpu.memory_space<vmem>>, vector<1x2x32xf32>
    %176 = vector.shape_cast %175 : vector<1x2x32xf32> to vector<2x32xf32>
    %177 = vector.shape_cast %174 : vector<2x32xf32> to vector<1x2x32xf32>
    tpu.vector_store %arg10[%c6, %c0_51, %c0_52], %177 {strides = array<i32>} : memref<8x2x32xf32, #tpu.memory_space<vmem>>, vector<1x2x32xf32>,
    %178 = vector.extract_strided_slice %7 {offsets = [14, 0], sizes = [2, 128], strides = [1, 1]} : vector<16x128xf32> to vector<2x128xf32>
    %cst_53 = arith.constant dense<0.000000e+00> : vector<2x128xf32>
    %179 = tpu.matmul %174, %3, %cst_53 {dimension_numbers = #tpu.dot_dimension_numbers<[1], [0], [0], [1], [0, 0, 1, 1], [], []>} : vector<2x32xf32>, vector<32x128xf32>, vector<2x128xf32> -> vector<2x128xf32>
    %180 = arith.addf %178, %179 : vector<2x128xf32>
    %181 = arith.negf %180 : vector<2x128xf32>
    %182 = math.exp %181 : vector<2x128xf32>
    %cst_54 = arith.constant 1.000000e+00 : f32
    %183 = vector.broadcast %cst_54 : f32 to vector<2x128xf32>
    %184 = arith.addf %183, %182 : vector<2x128xf32>
    %185 = arith.divf %183, %184 : vector<2x128xf32>
    %186 = vector.extract_strided_slice %185 {offsets = [0, 0], sizes = [2, 32], strides = [1, 1]} : vector<2x128xf32> to vector<2x32xf32>
    %187 = vector.extract_strided_slice %185 {offsets = [0, 32], sizes = [2, 32], strides = [1, 1]} : vector<2x128xf32> to vector<2x32xf32>
    %188 = vector.extract_strided_slice %185 {offsets = [0, 64], sizes = [2, 32], strides = [1, 1]} : vector<2x128xf32> to vector<2x32xf32>
    %cst_55 = arith.constant 2.000000e+00 : f32
    %189 = vector.broadcast %cst_55 : f32 to vector<2x32xf32>
    %190 = arith.mulf %189, %188 : vector<2x32xf32>
    %cst_56 = arith.constant 1.000000e+00 : f32
    %191 = vector.broadcast %cst_56 : f32 to vector<2x32xf32>
    %192 = arith.subf %190, %191 : vector<2x32xf32>
    %193 = vector.extract_strided_slice %185 {offsets = [0, 96], sizes = [2, 32], strides = [1, 1]} : vector<2x128xf32> to vector<2x32xf32>
    %194 = arith.mulf %187, %172 : vector<2x32xf32>
    %195 = arith.mulf %186, %192 : vector<2x32xf32>
    %196 = arith.addf %194, %195 : vector<2x32xf32>
    %197 = math.tanh %196 : vector<2x32xf32>
    %198 = arith.mulf %193, %197 : vector<2x32xf32>
    %c7 = arith.constant 7 : index
    %c0_57 = arith.constant 0 : index
    %c0_58 = arith.constant 0 : index
    %199 = vector.load %arg10[%c7, %c0_57, %c0_58] : memref<8x2x32xf32, #tpu.memory_space<vmem>>, vector<1x2x32xf32>
    %200 = vector.shape_cast %199 : vector<1x2x32xf32> to vector<2x32xf32>
    %201 = vector.shape_cast %198 : vector<2x32xf32> to vector<1x2x32xf32>
    tpu.vector_store %arg10[%c7, %c0_57, %c0_58], %201 {strides = array<i32>} : memref<8x2x32xf32, #tpu.memory_space<vmem>>, vector<1x2x32xf32>,
    %c0_59 = arith.constant 0 : index
    %c0_60 = arith.constant 0 : index
    %c0_61 = arith.constant 0 : index
    %202 = vector.load %arg8[%c0_59, %c0_60, %c0_61] : memref<2x2x32xf32, #tpu.memory_space<vmem>>, vector<1x2x32xf32>
    %203 = vector.shape_cast %202 : vector<1x2x32xf32> to vector<2x32xf32>
    %204 = vector.shape_cast %198 : vector<2x32xf32> to vector<1x2x32xf32>
    tpu.vector_store %arg8[%c0_59, %c0_60, %c0_61], %204 {strides = array<i32>} : memref<2x2x32xf32, #tpu.memory_space<vmem>>, vector<1x2x32xf32>,
    %c0_62 = arith.constant 0 : index
    %c0_63 = arith.constant 0 : index
    %c0_64 = arith.constant 0 : index
    %205 = vector.load %arg9[%c0_62, %c0_63, %c0_64] : memref<2x2x32xf32, #tpu.memory_space<vmem>>, vector<1x2x32xf32>
    %206 = vector.shape_cast %205 : vector<1x2x32xf32> to vector<2x32xf32>
    %207 = vector.shape_cast %196 : vector<2x32xf32> to vector<1x2x32xf32>
    tpu.vector_store %arg9[%c0_62, %c0_63, %c0_64], %207 {strides = array<i32>} : memref<2x2x32xf32, #tpu.memory_space<vmem>>, vector<1x2x32xf32>,
    %c0_65 = arith.constant 0 : index
    %c0_66 = arith.constant 0 : index
    %c0_67 = arith.constant 0 : index
    %208 = vector.load %arg10[%c0_65, %c0_66, %c0_67] : memref<8x2x32xf32, #tpu.memory_space<vmem>>, vector<8x2x32xf32>
    %209 = vector.shape_cast %208 : vector<8x2x32xf32> to vector<16x32xf32>
    %c0_68 = arith.constant 0 : index
    %c0_69 = arith.constant 0 : index
    %210 = vector.load %arg2[%c0_68, %c0_69] : memref<32x128xf32, #tpu.memory_space<vmem>>, vector<32x128xf32>
    %c0_70 = arith.constant 0 : index
    %c0_71 = arith.constant 0 : index
    %211 = vector.load %arg4[%c0_70, %c0_71] : memref<32x128xf32, #tpu.memory_space<vmem>>, vector<32x128xf32>
    %c0_72 = arith.constant 0 : index
    %c0_73 = arith.constant 0 : index
    %212 = vector.load %arg6[%c0_72, %c0_73] : memref<1x128xf32, #tpu.memory_space<vmem>>, vector<1x128xf32>
    %cst_74 = arith.constant dense<0.000000e+00> : vector<16x128xf32>
    %213 = tpu.matmul %209, %210, %cst_74 {dimension_numbers = #tpu.dot_dimension_numbers<[1], [0], [0], [1], [0, 0, 1, 1], [], []>} : vector<16x32xf32>, vector<32x128xf32>, vector<16x128xf32> -> vector<16x128xf32>
    %214 = vector.broadcast %212 : vector<1x128xf32> to vector<16x128xf32>
    %215 = arith.addf %213, %214 : vector<16x128xf32>
    %cst_75 = arith.constant 0.000000e+00 : f32
    %216 = vector.broadcast %cst_75 : f32 to vector<2x32xf32>
    %cst_76 = arith.constant 0.000000e+00 : f32
    %217 = vector.broadcast %cst_76 : f32 to vector<2x32xf32>
    %218 = vector.extract_strided_slice %215 {offsets = [0, 0], sizes = [2, 128], strides = [1, 1]} : vector<16x128xf32> to vector<2x128xf32>
    %cst_77 = arith.constant dense<0.000000e+00> : vector<2x128xf32>
    %219 = tpu.matmul %216, %211, %cst_77 {dimension_numbers = #tpu.dot_dimension_numbers<[1], [0], [0], [1], [0, 0, 1, 1], [], []>} : vector<2x32xf32>, vector<32x128xf32>, vector<2x128xf32> -> vector<2x128xf32>
    %220 = arith.addf %218, %219 : vector<2x128xf32>
    %221 = arith.negf %220 : vector<2x128xf32>
    %222 = math.exp %221 : vector<2x128xf32>
    %cst_78 = arith.constant 1.000000e+00 : f32
    %223 = vector.broadcast %cst_78 : f32 to vector<2x128xf32>
    %224 = arith.addf %223, %222 : vector<2x128xf32>
    %225 = arith.divf %223, %224 : vector<2x128xf32>
    %226 = vector.extract_strided_slice %225 {offsets = [0, 0], sizes = [2, 32], strides = [1, 1]} : vector<2x128xf32> to vector<2x32xf32>
    %227 = vector.extract_strided_slice %225 {offsets = [0, 32], sizes = [2, 32], strides = [1, 1]} : vector<2x128xf32> to vector<2x32xf32>
    %228 = vector.extract_strided_slice %225 {offsets = [0, 64], sizes = [2, 32], strides = [1, 1]} : vector<2x128xf32> to vector<2x32xf32>
    %cst_79 = arith.constant 2.000000e+00 : f32
    %229 = vector.broadcast %cst_79 : f32 to vector<2x32xf32>
    %230 = arith.mulf %229, %228 : vector<2x32xf32>
    %cst_80 = arith.constant 1.000000e+00 : f32
    %231 = vector.broadcast %cst_80 : f32 to vector<2x32xf32>
    %232 = arith.subf %230, %231 : vector<2x32xf32>
    %233 = vector.extract_strided_slice %225 {offsets = [0, 96], sizes = [2, 32], strides = [1, 1]} : vector<2x128xf32> to vector<2x32xf32>
    %234 = arith.mulf %227, %217 : vector<2x32xf32>
    %235 = arith.mulf %226, %232 : vector<2x32xf32>
    %236 = arith.addf %234, %235 : vector<2x32xf32>
    %237 = math.tanh %236 : vector<2x32xf32>
    %238 = arith.mulf %233, %237 : vector<2x32xf32>
    %c0_81 = arith.constant 0 : index
    %c0_82 = arith.constant 0 : index
    %c0_83 = arith.constant 0 : index
    %239 = vector.load %arg7[%c0_81, %c0_82, %c0_83] : memref<8x2x32xf32, #tpu.memory_space<vmem>>, vector<1x2x32xf32>
    %240 = vector.shape_cast %239 : vector<1x2x32xf32> to vector<2x32xf32>
    %241 = vector.shape_cast %238 : vector<2x32xf32> to vector<1x2x32xf32>
    tpu.vector_store %arg7[%c0_81, %c0_82, %c0_83], %241 {strides = array<i32>} : memref<8x2x32xf32, #tpu.memory_space<vmem>>, vector<1x2x32xf32>,
    %242 = vector.extract_strided_slice %215 {offsets = [2, 0], sizes = [2, 128], strides = [1, 1]} : vector<16x128xf32> to vector<2x128xf32>
    %cst_84 = arith.constant dense<0.000000e+00> : vector<2x128xf32>
    %243 = tpu.matmul %238, %211, %cst_84 {dimension_numbers = #tpu.dot_dimension_numbers<[1], [0], [0], [1], [0, 0, 1, 1], [], []>} : vector<2x32xf32>, vector<32x128xf32>, vector<2x128xf32> -> vector<2x128xf32>
    %244 = arith.addf %242, %243 : vector<2x128xf32>
    %245 = arith.negf %244 : vector<2x128xf32>
    %246 = math.exp %245 : vector<2x128xf32>
    %cst_85 = arith.constant 1.000000e+00 : f32
    %247 = vector.broadcast %cst_85 : f32 to vector<2x128xf32>
    %248 = arith.addf %247, %246 : vector<2x128xf32>
    %249 = arith.divf %247, %248 : vector<2x128xf32>
    %250 = vector.extract_strided_slice %249 {offsets = [0, 0], sizes = [2, 32], strides = [1, 1]} : vector<2x128xf32> to vector<2x32xf32>
    %251 = vector.extract_strided_slice %249 {offsets = [0, 32], sizes = [2, 32], strides = [1, 1]} : vector<2x128xf32> to vector<2x32xf32>
    %252 = vector.extract_strided_slice %249 {offsets = [0, 64], sizes = [2, 32], strides = [1, 1]} : vector<2x128xf32> to vector<2x32xf32>
    %cst_86 = arith.constant 2.000000e+00 : f32
    %253 = vector.broadcast %cst_86 : f32 to vector<2x32xf32>
    %254 = arith.mulf %253, %252 : vector<2x32xf32>
    %cst_87 = arith.constant 1.000000e+00 : f32
    %255 = vector.broadcast %cst_87 : f32 to vector<2x32xf32>
    %256 = arith.subf %254, %255 : vector<2x32xf32>
    %257 = vector.extract_strided_slice %249 {offsets = [0, 96], sizes = [2, 32], strides = [1, 1]} : vector<2x128xf32> to vector<2x32xf32>
    %258 = arith.mulf %251, %236 : vector<2x32xf32>
    %259 = arith.mulf %250, %256 : vector<2x32xf32>
    %260 = arith.addf %258, %259 : vector<2x32xf32>
    %261 = math.tanh %260 : vector<2x32xf32>
    %262 = arith.mulf %257, %261 : vector<2x32xf32>
    %c1_88 = arith.constant 1 : index
    %c0_89 = arith.constant 0 : index
    %c0_90 = arith.constant 0 : index
    %263 = vector.load %arg7[%c1_88, %c0_89, %c0_90] : memref<8x2x32xf32, #tpu.memory_space<vmem>>, vector<1x2x32xf32>
    %264 = vector.shape_cast %263 : vector<1x2x32xf32> to vector<2x32xf32>
    %265 = vector.shape_cast %262 : vector<2x32xf32> to vector<1x2x32xf32>
    tpu.vector_store %arg7[%c1_88, %c0_89, %c0_90], %265 {strides = array<i32>} : memref<8x2x32xf32, #tpu.memory_space<vmem>>, vector<1x2x32xf32>,
    %266 = vector.extract_strided_slice %215 {offsets = [4, 0], sizes = [2, 128], strides = [1, 1]} : vector<16x128xf32> to vector<2x128xf32>
    %cst_91 = arith.constant dense<0.000000e+00> : vector<2x128xf32>
    %267 = tpu.matmul %262, %211, %cst_91 {dimension_numbers = #tpu.dot_dimension_numbers<[1], [0], [0], [1], [0, 0, 1, 1], [], []>} : vector<2x32xf32>, vector<32x128xf32>, vector<2x128xf32> -> vector<2x128xf32>
    %268 = arith.addf %266, %267 : vector<2x128xf32>
    %269 = arith.negf %268 : vector<2x128xf32>
    %270 = math.exp %269 : vector<2x128xf32>
    %cst_92 = arith.constant 1.000000e+00 : f32
    %271 = vector.broadcast %cst_92 : f32 to vector<2x128xf32>
    %272 = arith.addf %271, %270 : vector<2x128xf32>
    %273 = arith.divf %271, %272 : vector<2x128xf32>
    %274 = vector.extract_strided_slice %273 {offsets = [0, 0], sizes = [2, 32], strides = [1, 1]} : vector<2x128xf32> to vector<2x32xf32>
    %275 = vector.extract_strided_slice %273 {offsets = [0, 32], sizes = [2, 32], strides = [1, 1]} : vector<2x128xf32> to vector<2x32xf32>
    %276 = vector.extract_strided_slice %273 {offsets = [0, 64], sizes = [2, 32], strides = [1, 1]} : vector<2x128xf32> to vector<2x32xf32>
    %cst_93 = arith.constant 2.000000e+00 : f32
    %277 = vector.broadcast %cst_93 : f32 to vector<2x32xf32>
    %278 = arith.mulf %277, %276 : vector<2x32xf32>
    %cst_94 = arith.constant 1.000000e+00 : f32
    %279 = vector.broadcast %cst_94 : f32 to vector<2x32xf32>
    %280 = arith.subf %278, %279 : vector<2x32xf32>
    %281 = vector.extract_strided_slice %273 {offsets = [0, 96], sizes = [2, 32], strides = [1, 1]} : vector<2x128xf32> to vector<2x32xf32>
    %282 = arith.mulf %275, %260 : vector<2x32xf32>
    %283 = arith.mulf %274, %280 : vector<2x32xf32>
    %284 = arith.addf %282, %283 : vector<2x32xf32>
    %285 = math.tanh %284 : vector<2x32xf32>
    %286 = arith.mulf %281, %285 : vector<2x32xf32>
    %c2_95 = arith.constant 2 : index
    %c0_96 = arith.constant 0 : index
    %c0_97 = arith.constant 0 : index
    %287 = vector.load %arg7[%c2_95, %c0_96, %c0_97] : memref<8x2x32xf32, #tpu.memory_space<vmem>>, vector<1x2x32xf32>
    %288 = vector.shape_cast %287 : vector<1x2x32xf32> to vector<2x32xf32>
    %289 = vector.shape_cast %286 : vector<2x32xf32> to vector<1x2x32xf32>
    tpu.vector_store %arg7[%c2_95, %c0_96, %c0_97], %289 {strides = array<i32>} : memref<8x2x32xf32, #tpu.memory_space<vmem>>, vector<1x2x32xf32>,
    %290 = vector.extract_strided_slice %215 {offsets = [6, 0], sizes = [2, 128], strides = [1, 1]} : vector<16x128xf32> to vector<2x128xf32>
    %cst_98 = arith.constant dense<0.000000e+00> : vector<2x128xf32>
    %291 = tpu.matmul %286, %211, %cst_98 {dimension_numbers = #tpu.dot_dimension_numbers<[1], [0], [0], [1], [0, 0, 1, 1], [], []>} : vector<2x32xf32>, vector<32x128xf32>, vector<2x128xf32> -> vector<2x128xf32>
    %292 = arith.addf %290, %291 : vector<2x128xf32>
    %293 = arith.negf %292 : vector<2x128xf32>
    %294 = math.exp %293 : vector<2x128xf32>
    %cst_99 = arith.constant 1.000000e+00 : f32
    %295 = vector.broadcast %cst_99 : f32 to vector<2x128xf32>
    %296 = arith.addf %295, %294 : vector<2x128xf32>
    %297 = arith.divf %295, %296 : vector<2x128xf32>
    %298 = vector.extract_strided_slice %297 {offsets = [0, 0], sizes = [2, 32], strides = [1, 1]} : vector<2x128xf32> to vector<2x32xf32>
    %299 = vector.extract_strided_slice %297 {offsets = [0, 32], sizes = [2, 32], strides = [1, 1]} : vector<2x128xf32> to vector<2x32xf32>
    %300 = vector.extract_strided_slice %297 {offsets = [0, 64], sizes = [2, 32], strides = [1, 1]} : vector<2x128xf32> to vector<2x32xf32>
    %cst_100 = arith.constant 2.000000e+00 : f32
    %301 = vector.broadcast %cst_100 : f32 to vector<2x32xf32>
    %302 = arith.mulf %301, %300 : vector<2x32xf32>
    %cst_101 = arith.constant 1.000000e+00 : f32
    %303 = vector.broadcast %cst_101 : f32 to vector<2x32xf32>
    %304 = arith.subf %302, %303 : vector<2x32xf32>
    %305 = vector.extract_strided_slice %297 {offsets = [0, 96], sizes = [2, 32], strides = [1, 1]} : vector<2x128xf32> to vector<2x32xf32>
    %306 = arith.mulf %299, %284 : vector<2x32xf32>
    %307 = arith.mulf %298, %304 : vector<2x32xf32>
    %308 = arith.addf %306, %307 : vector<2x32xf32>
    %309 = math.tanh %308 : vector<2x32xf32>
    %310 = arith.mulf %305, %309 : vector<2x32xf32>
    %c3_102 = arith.constant 3 : index
    %c0_103 = arith.constant 0 : index
    %c0_104 = arith.constant 0 : index
    %311 = vector.load %arg7[%c3_102, %c0_103, %c0_104] : memref<8x2x32xf32, #tpu.memory_space<vmem>>, vector<1x2x32xf32>
    %312 = vector.shape_cast %311 : vector<1x2x32xf32> to vector<2x32xf32>
    %313 = vector.shape_cast %310 : vector<2x32xf32> to vector<1x2x32xf32>
    tpu.vector_store %arg7[%c3_102, %c0_103, %c0_104], %313 {strides = array<i32>} : memref<8x2x32xf32, #tpu.memory_space<vmem>>, vector<1x2x32xf32>,
    %314 = vector.extract_strided_slice %215 {offsets = [8, 0], sizes = [2, 128], strides = [1, 1]} : vector<16x128xf32> to vector<2x128xf32>
    %cst_105 = arith.constant dense<0.000000e+00> : vector<2x128xf32>
    %315 = tpu.matmul %310, %211, %cst_105 {dimension_numbers = #tpu.dot_dimension_numbers<[1], [0], [0], [1], [0, 0, 1, 1], [], []>} : vector<2x32xf32>, vector<32x128xf32>, vector<2x128xf32> -> vector<2x128xf32>
    %316 = arith.addf %314, %315 : vector<2x128xf32>
    %317 = arith.negf %316 : vector<2x128xf32>
    %318 = math.exp %317 : vector<2x128xf32>
    %cst_106 = arith.constant 1.000000e+00 : f32
    %319 = vector.broadcast %cst_106 : f32 to vector<2x128xf32>
    %320 = arith.addf %319, %318 : vector<2x128xf32>
    %321 = arith.divf %319, %320 : vector<2x128xf32>
    %322 = vector.extract_strided_slice %321 {offsets = [0, 0], sizes = [2, 32], strides = [1, 1]} : vector<2x128xf32> to vector<2x32xf32>
    %323 = vector.extract_strided_slice %321 {offsets = [0, 32], sizes = [2, 32], strides = [1, 1]} : vector<2x128xf32> to vector<2x32xf32>
    %324 = vector.extract_strided_slice %321 {offsets = [0, 64], sizes = [2, 32], strides = [1, 1]} : vector<2x128xf32> to vector<2x32xf32>
    %cst_107 = arith.constant 2.000000e+00 : f32
    %325 = vector.broadcast %cst_107 : f32 to vector<2x32xf32>
    %326 = arith.mulf %325, %324 : vector<2x32xf32>
    %cst_108 = arith.constant 1.000000e+00 : f32
    %327 = vector.broadcast %cst_108 : f32 to vector<2x32xf32>
    %328 = arith.subf %326, %327 : vector<2x32xf32>
    %329 = vector.extract_strided_slice %321 {offsets = [0, 96], sizes = [2, 32], strides = [1, 1]} : vector<2x128xf32> to vector<2x32xf32>
    %330 = arith.mulf %323, %308 : vector<2x32xf32>
    %331 = arith.mulf %322, %328 : vector<2x32xf32>
    %332 = arith.addf %330, %331 : vector<2x32xf32>
    %333 = math.tanh %332 : vector<2x32xf32>
    %334 = arith.mulf %329, %333 : vector<2x32xf32>
    %c4_109 = arith.constant 4 : index
    %c0_110 = arith.constant 0 : index
    %c0_111 = arith.constant 0 : index
    %335 = vector.load %arg7[%c4_109, %c0_110, %c0_111] : memref<8x2x32xf32, #tpu.memory_space<vmem>>, vector<1x2x32xf32>
    %336 = vector.shape_cast %335 : vector<1x2x32xf32> to vector<2x32xf32>
    %337 = vector.shape_cast %334 : vector<2x32xf32> to vector<1x2x32xf32>
    tpu.vector_store %arg7[%c4_109, %c0_110, %c0_111], %337 {strides = array<i32>} : memref<8x2x32xf32, #tpu.memory_space<vmem>>, vector<1x2x32xf32>,
    %338 = vector.extract_strided_slice %215 {offsets = [10, 0], sizes = [2, 128], strides = [1, 1]} : vector<16x128xf32> to vector<2x128xf32>
    %cst_112 = arith.constant dense<0.000000e+00> : vector<2x128xf32>
    %339 = tpu.matmul %334, %211, %cst_112 {dimension_numbers = #tpu.dot_dimension_numbers<[1], [0], [0], [1], [0, 0, 1, 1], [], []>} : vector<2x32xf32>, vector<32x128xf32>, vector<2x128xf32> -> vector<2x128xf32>
    %340 = arith.addf %338, %339 : vector<2x128xf32>
    %341 = arith.negf %340 : vector<2x128xf32>
    %342 = math.exp %341 : vector<2x128xf32>
    %cst_113 = arith.constant 1.000000e+00 : f32
    %343 = vector.broadcast %cst_113 : f32 to vector<2x128xf32>
    %344 = arith.addf %343, %342 : vector<2x128xf32>
    %345 = arith.divf %343, %344 : vector<2x128xf32>
    %346 = vector.extract_strided_slice %345 {offsets = [0, 0], sizes = [2, 32], strides = [1, 1]} : vector<2x128xf32> to vector<2x32xf32>
    %347 = vector.extract_strided_slice %345 {offsets = [0, 32], sizes = [2, 32], strides = [1, 1]} : vector<2x128xf32> to vector<2x32xf32>
    %348 = vector.extract_strided_slice %345 {offsets = [0, 64], sizes = [2, 32], strides = [1, 1]} : vector<2x128xf32> to vector<2x32xf32>
    %cst_114 = arith.constant 2.000000e+00 : f32
    %349 = vector.broadcast %cst_114 : f32 to vector<2x32xf32>
    %350 = arith.mulf %349, %348 : vector<2x32xf32>
    %cst_115 = arith.constant 1.000000e+00 : f32
    %351 = vector.broadcast %cst_115 : f32 to vector<2x32xf32>
    %352 = arith.subf %350, %351 : vector<2x32xf32>
    %353 = vector.extract_strided_slice %345 {offsets = [0, 96], sizes = [2, 32], strides = [1, 1]} : vector<2x128xf32> to vector<2x32xf32>
    %354 = arith.mulf %347, %332 : vector<2x32xf32>
    %355 = arith.mulf %346, %352 : vector<2x32xf32>
    %356 = arith.addf %354, %355 : vector<2x32xf32>
    %357 = math.tanh %356 : vector<2x32xf32>
    %358 = arith.mulf %353, %357 : vector<2x32xf32>
    %c5_116 = arith.constant 5 : index
    %c0_117 = arith.constant 0 : index
    %c0_118 = arith.constant 0 : index
    %359 = vector.load %arg7[%c5_116, %c0_117, %c0_118] : memref<8x2x32xf32, #tpu.memory_space<vmem>>, vector<1x2x32xf32>
    %360 = vector.shape_cast %359 : vector<1x2x32xf32> to vector<2x32xf32>
    %361 = vector.shape_cast %358 : vector<2x32xf32> to vector<1x2x32xf32>
    tpu.vector_store %arg7[%c5_116, %c0_117, %c0_118], %361 {strides = array<i32>} : memref<8x2x32xf32, #tpu.memory_space<vmem>>, vector<1x2x32xf32>,
    %362 = vector.extract_strided_slice %215 {offsets = [12, 0], sizes = [2, 128], strides = [1, 1]} : vector<16x128xf32> to vector<2x128xf32>
    %cst_119 = arith.constant dense<0.000000e+00> : vector<2x128xf32>
    %363 = tpu.matmul %358, %211, %cst_119 {dimension_numbers = #tpu.dot_dimension_numbers<[1], [0], [0], [1], [0, 0, 1, 1], [], []>} : vector<2x32xf32>, vector<32x128xf32>, vector<2x128xf32> -> vector<2x128xf32>
    %364 = arith.addf %362, %363 : vector<2x128xf32>
    %365 = arith.negf %364 : vector<2x128xf32>
    %366 = math.exp %365 : vector<2x128xf32>
    %cst_120 = arith.constant 1.000000e+00 : f32
    %367 = vector.broadcast %cst_120 : f32 to vector<2x128xf32>
    %368 = arith.addf %367, %366 : vector<2x128xf32>
    %369 = arith.divf %367, %368 : vector<2x128xf32>
    %370 = vector.extract_strided_slice %369 {offsets = [0, 0], sizes = [2, 32], strides = [1, 1]} : vector<2x128xf32> to vector<2x32xf32>
    %371 = vector.extract_strided_slice %369 {offsets = [0, 32], sizes = [2, 32], strides = [1, 1]} : vector<2x128xf32> to vector<2x32xf32>
    %372 = vector.extract_strided_slice %369 {offsets = [0, 64], sizes = [2, 32], strides = [1, 1]} : vector<2x128xf32> to vector<2x32xf32>
    %cst_121 = arith.constant 2.000000e+00 : f32
    %373 = vector.broadcast %cst_121 : f32 to vector<2x32xf32>
    %374 = arith.mulf %373, %372 : vector<2x32xf32>
    %cst_122 = arith.constant 1.000000e+00 : f32
    %375 = vector.broadcast %cst_122 : f32 to vector<2x32xf32>
    %376 = arith.subf %374, %375 : vector<2x32xf32>
    %377 = vector.extract_strided_slice %369 {offsets = [0, 96], sizes = [2, 32], strides = [1, 1]} : vector<2x128xf32> to vector<2x32xf32>
    %378 = arith.mulf %371, %356 : vector<2x32xf32>
    %379 = arith.mulf %370, %376 : vector<2x32xf32>
    %380 = arith.addf %378, %379 : vector<2x32xf32>
    %381 = math.tanh %380 : vector<2x32xf32>
    %382 = arith.mulf %377, %381 : vector<2x32xf32>
    %c6_123 = arith.constant 6 : index
    %c0_124 = arith.constant 0 : index
    %c0_125 = arith.constant 0 : index
    %383 = vector.load %arg7[%c6_123, %c0_124, %c0_125] : memref<8x2x32xf32, #tpu.memory_space<vmem>>, vector<1x2x32xf32>
    %384 = vector.shape_cast %383 : vector<1x2x32xf32> to vector<2x32xf32>
    %385 = vector.shape_cast %382 : vector<2x32xf32> to vector<1x2x32xf32>
    tpu.vector_store %arg7[%c6_123, %c0_124, %c0_125], %385 {strides = array<i32>} : memref<8x2x32xf32, #tpu.memory_space<vmem>>, vector<1x2x32xf32>,
    %386 = vector.extract_strided_slice %215 {offsets = [14, 0], sizes = [2, 128], strides = [1, 1]} : vector<16x128xf32> to vector<2x128xf32>
    %cst_126 = arith.constant dense<0.000000e+00> : vector<2x128xf32>
    %387 = tpu.matmul %382, %211, %cst_126 {dimension_numbers = #tpu.dot_dimension_numbers<[1], [0], [0], [1], [0, 0, 1, 1], [], []>} : vector<2x32xf32>, vector<32x128xf32>, vector<2x128xf32> -> vector<2x128xf32>
    %388 = arith.addf %386, %387 : vector<2x128xf32>
    %389 = arith.negf %388 : vector<2x128xf32>
    %390 = math.exp %389 : vector<2x128xf32>
    %cst_127 = arith.constant 1.000000e+00 : f32
    %391 = vector.broadcast %cst_127 : f32 to vector<2x128xf32>
    %392 = arith.addf %391, %390 : vector<2x128xf32>
    %393 = arith.divf %391, %392 : vector<2x128xf32>
    %394 = vector.extract_strided_slice %393 {offsets = [0, 0], sizes = [2, 32], strides = [1, 1]} : vector<2x128xf32> to vector<2x32xf32>
    %395 = vector.extract_strided_slice %393 {offsets = [0, 32], sizes = [2, 32], strides = [1, 1]} : vector<2x128xf32> to vector<2x32xf32>
    %396 = vector.extract_strided_slice %393 {offsets = [0, 64], sizes = [2, 32], strides = [1, 1]} : vector<2x128xf32> to vector<2x32xf32>
    %cst_128 = arith.constant 2.000000e+00 : f32
    %397 = vector.broadcast %cst_128 : f32 to vector<2x32xf32>
    %398 = arith.mulf %397, %396 : vector<2x32xf32>
    %cst_129 = arith.constant 1.000000e+00 : f32
    %399 = vector.broadcast %cst_129 : f32 to vector<2x32xf32>
    %400 = arith.subf %398, %399 : vector<2x32xf32>
    %401 = vector.extract_strided_slice %393 {offsets = [0, 96], sizes = [2, 32], strides = [1, 1]} : vector<2x128xf32> to vector<2x32xf32>
    %402 = arith.mulf %395, %380 : vector<2x32xf32>
    %403 = arith.mulf %394, %400 : vector<2x32xf32>
    %404 = arith.addf %402, %403 : vector<2x32xf32>
    %405 = math.tanh %404 : vector<2x32xf32>
    %406 = arith.mulf %401, %405 : vector<2x32xf32>
    %c7_130 = arith.constant 7 : index
    %c0_131 = arith.constant 0 : index
    %c0_132 = arith.constant 0 : index
    %407 = vector.load %arg7[%c7_130, %c0_131, %c0_132] : memref<8x2x32xf32, #tpu.memory_space<vmem>>, vector<1x2x32xf32>
    %408 = vector.shape_cast %407 : vector<1x2x32xf32> to vector<2x32xf32>
    %409 = vector.shape_cast %406 : vector<2x32xf32> to vector<1x2x32xf32>
    tpu.vector_store %arg7[%c7_130, %c0_131, %c0_132], %409 {strides = array<i32>} : memref<8x2x32xf32, #tpu.memory_space<vmem>>, vector<1x2x32xf32>,
    %c1_133 = arith.constant 1 : index
    %c0_134 = arith.constant 0 : index
    %c0_135 = arith.constant 0 : index
    %410 = vector.load %arg8[%c1_133, %c0_134, %c0_135] : memref<2x2x32xf32, #tpu.memory_space<vmem>>, vector<1x2x32xf32>
    %411 = vector.shape_cast %410 : vector<1x2x32xf32> to vector<2x32xf32>
    %412 = vector.shape_cast %406 : vector<2x32xf32> to vector<1x2x32xf32>
    tpu.vector_store %arg8[%c1_133, %c0_134, %c0_135], %412 {strides = array<i32>} : memref<2x2x32xf32, #tpu.memory_space<vmem>>, vector<1x2x32xf32>,
    %c1_136 = arith.constant 1 : index
    %c0_137 = arith.constant 0 : index
    %c0_138 = arith.constant 0 : index
    %413 = vector.load %arg9[%c1_136, %c0_137, %c0_138] : memref<2x2x32xf32, #tpu.memory_space<vmem>>, vector<1x2x32xf32>
    %414 = vector.shape_cast %413 : vector<1x2x32xf32> to vector<2x32xf32>
    %415 = vector.shape_cast %404 : vector<2x32xf32> to vector<1x2x32xf32>
    tpu.vector_store %arg9[%c1_136, %c0_137, %c0_138], %415 {strides = array<i32>} : memref<2x2x32xf32, #tpu.memory_space<vmem>>, vector<1x2x32xf32>,
    return
  }
}

</mosaic_0001>

<llo_original>
// kernel: tpu_custom_call.1
$region0: #{tpu_custom_call.1}
  #allocation0 [shape = 'u32[]', space=smem, size = 0x4, offset = 0x4, fixed_abs, tag = 'smem constant byte address 0x4 - core index']
  #allocation1 [shape = 'u32[144,128]{1,0:T(1,128)}', space=vmem, size = 0x12000, scoped, tag = 'internal scratch']
  #allocation2 [shape = 'f32[8,2,32]{2,1,0:T(2,128)}', space=vmem, size = 0x2000, scoped, tag = 'scratch operand']
  %s0 = inlined_call_operand.hbm [shape: f32[8,2,16], index: 0, kind: input, shape index: {}]
  %s1 = inlined_call_operand.hbm [shape: f32[16,128], index: 1, kind: input, shape index: {}]
  %s2 = inlined_call_operand.hbm [shape: f32[32,128], index: 2, kind: input, shape index: {}]
  %s3 = inlined_call_operand.hbm [shape: f32[32,128], index: 3, kind: input, shape index: {}]
  %s4 = inlined_call_operand.hbm [shape: f32[32,128], index: 4, kind: input, shape index: {}]
  %s5 = inlined_call_operand.vmem [shape: f32[1,128], index: 5, kind: input, shape index: {}]
  %s6 = inlined_call_operand.vmem [shape: f32[1,128], index: 6, kind: input, shape index: {}]
  %s7 = inlined_call_operand.hbm [shape: f32[8,2,32], index: 7, kind: output, shape index: {0}]
  %s8 = inlined_call_operand.hbm [shape: f32[2,2,32], index: 8, kind: output, shape index: {1}]
  %s9 = inlined_call_operand.hbm [shape: f32[2,2,32], index: 9, kind: output, shape index: {2}]
  %10 = xla_tuple %s7, %s8, %s9
  %s11 = sld [smem:[#allocation0]]
  $region74: #{tpu_custom_call.1} parent=0
    _
  %s13 = ssub.s32 1, %s11
  %s14 = scalar_select 0, %s13, %s11
  $region1: #{tpu_custom_call.1} parent=0
    #allocation3 [shape = 'u8[8192]{0}', space=vmem, size = 0x2000, scoped, tag = 'input window, operand 0, single buffered']
    #allocation4 [shape = 's32[1]{0}', space=sflag, size = 0x4, scoped, tag = 'scoped memory for tpu_custom_call.1']
    #allocation5 [shape = 's32[1]{0}', space=sflag, size = 0x4, scoped, tag = 'scoped memory for tpu_custom_call.1']
    #allocation6 [shape = 'u8[8192]{0}', space=vmem, size = 0x2000, scoped, tag = 'input window, operand 1, single buffered']
    #allocation7 [shape = 's32[1]{0}', space=sflag, size = 0x4, scoped, tag = 'scoped memory for tpu_custom_call.1']
    #allocation8 [shape = 'u8[16384]{0}', space=vmem, size = 0x4000, scoped, tag = 'input window, operand 2, single buffered']
    #allocation9 [shape = 'u8[16384]{0}', space=vmem, size = 0x4000, scoped, tag = 'input window, operand 3, single buffered']
    #allocation10 [shape = 's32[1]{0}', space=sflag, size = 0x4, scoped, tag = 'scoped memory for tpu_custom_call.1']
    #allocation11 [shape = 'u8[16384]{0}', space=vmem, size = 0x4000, scoped, tag = 'input window, operand 4, single buffered']
    #allocation12 [shape = 'u8[8192]{0}', space=vmem, size = 0x2000, scoped, tag = 'output window, operand 0, single buffered']
    #allocation13 [shape = 'u8[2048]{0}', space=vmem, size = 0x800, scoped, tag = 'output window, operand 1, single buffered']
    #allocation14 [shape = 's32[1]{0}', space=sflag, size = 0x4, scoped, tag = 'scoped memory for tpu_custom_call.1']
    #allocation15 [shape = 'u8[2048]{0}', space=vmem, size = 0x800, scoped, tag = 'output window, operand 2, single buffered']
    %15 = vsyncpa [#allocation4], 0
    %16 = vsyncpa [#allocation7], 0
    %17 = vsyncpa [#allocation10], 0
    %18 = vsyncpa [#allocation5], 0
    %19 = vsyncpa [#allocation14], 0
    // Predicated region
    $region2: #{tpu_custom_call.1} parent=1 // pred_check
      _
    $region3: #{tpu_custom_call.1} parent=1 // pred_check_branch
      %21 = sbr.rel (0) target = $region5
    $region4: #{tpu_custom_call.1} parent=1 // pred_region
      %s23 = ssub.s32 256, 256
      %24 = vsyncadd [#allocation4], %s23
      %s25 = sshll.u32 [#allocation3], 4
      %s26 = int_to_ptr.vmem [resolvable:$true] %s25
      %31 = dma.hbm_to_vmem [thread:$0]  %s0, 256, %s26, [#allocation4], 32, 32, 2
    $region5: #{tpu_custom_call.1} parent=1 // pred_fallthru
      _
    // Predicated region
    $region6: #{tpu_custom_call.1} parent=1 // pred_check
      _
    $region7: #{tpu_custom_call.1} parent=1 // pred_check_branch
      %33 = sbr.rel (0) target = $region9
    $region8: #{tpu_custom_call.1} parent=1 // pred_region
      %s35 = ssub.s32 256, 256
      %36 = vsyncadd [#allocation7], %s35
      %s37 = sshll.u32 [#allocation6], 4
      %s38 = int_to_ptr.vmem [resolvable:$true] %s37
      %43 = dma.hbm_to_vmem [thread:$0]  %s1, 256, %s38, [#allocation7], 128, 128, 8
    $region9: #{tpu_custom_call.1} parent=1 // pred_fallthru
      _
    // Predicated region
    $region10: #{tpu_custom_call.1} parent=1 // pred_check
      _
    $region11: #{tpu_custom_call.1} parent=1 // pred_check_branch
      %45 = sbr.rel (0) target = $region13
    $region12: #{tpu_custom_call.1} parent=1 // pred_region
      %s47 = ssub.s32 512, 512
      %48 = vsyncadd [#allocation7], %s47
      %s49 = sshll.u32 [#allocation8], 4
      %s50 = int_to_ptr.vmem [resolvable:$true] %s49
      %55 = dma.hbm_to_vmem [thread:$0]  %s2, 512, %s50, [#allocation7], 128, 128, 8
    $region13: #{tpu_custom_call.1} parent=1 // pred_fallthru
      _
    // Predicated region
    $region14: #{tpu_custom_call.1} parent=1 // pred_check
      _
    $region15: #{tpu_custom_call.1} parent=1 // pred_check_branch
      %57 = sbr.rel (0) target = $region17
    $region16: #{tpu_custom_call.1} parent=1 // pred_region
      %s59 = ssub.s32 512, 512
      %60 = vsyncadd [#allocation10], %s59
      %s61 = sshll.u32 [#allocation9], 4
      %s62 = int_to_ptr.vmem [resolvable:$true] %s61
      %67 = dma.hbm_to_vmem [thread:$0]  %s3, 512, %s62, [#allocation10], 128, 128, 8
    $region17: #{tpu_custom_call.1} parent=1 // pred_fallthru
      _
    // Predicated region
    $region18: #{tpu_custom_call.1} parent=1 // pred_check
      _
    $region19: #{tpu_custom_call.1} parent=1 // pred_check_branch
      %69 = sbr.rel (0) target = $region21
    $region20: #{tpu_custom_call.1} parent=1 // pred_region
      %s71 = ssub.s32 512, 512
      %72 = vsyncadd [#allocation10], %s71
      %s73 = sshll.u32 [#allocation11], 4
      %s74 = int_to_ptr.vmem [resolvable:$true] %s73
      %79 = dma.hbm_to_vmem [thread:$0]  %s4, 512, %s74, [#allocation10], 128, 128, 8
    $region21: #{tpu_custom_call.1} parent=1 // pred_fallthru
      _
    // Predicated region
    $region22: #{tpu_custom_call.1} parent=1 // pred_check
      _
    $region23: #{tpu_custom_call.1} parent=1 // pred_check_branch
      %81 = sbr.rel (0) target = $region25
    $region24: #{tpu_custom_call.1} parent=1 // pred_region
      _
    $region25: #{tpu_custom_call.1} parent=1 // pred_fallthru
      _
    // Predicated region
    $region26: #{tpu_custom_call.1} parent=1 // pred_check
      _
    $region27: #{tpu_custom_call.1} parent=1 // pred_check_branch
      %83 = sbr.rel (0) target = $region29
    $region28: #{tpu_custom_call.1} parent=1 // pred_region
      _
    $region29: #{tpu_custom_call.1} parent=1 // pred_fallthru
      _
    // Predicated region
    $region30: #{tpu_custom_call.1} parent=1 // pred_check
      _
    $region31: #{tpu_custom_call.1} parent=1 // pred_check_branch
      %85 = sbr.rel (0) target = $region33
    $region32: #{tpu_custom_call.1} parent=1 // pred_region
      %86 = dma.done [#allocation4], 256
    $region33: #{tpu_custom_call.1} parent=1 // pred_fallthru
      _
    // Predicated region
    $region34: #{tpu_custom_call.1} parent=1 // pred_check
      _
    $region35: #{tpu_custom_call.1} parent=1 // pred_check_branch
      %88 = sbr.rel (0) target = $region37
    $region36: #{tpu_custom_call.1} parent=1 // pred_region
      %89 = dma.done [#allocation7], 256
    $region37: #{tpu_custom_call.1} parent=1 // pred_fallthru
      _
    // Predicated region
    $region38: #{tpu_custom_call.1} parent=1 // pred_check
      _
    $region39: #{tpu_custom_call.1} parent=1 // pred_check_branch
      %91 = sbr.rel (0) target = $region41
    $region40: #{tpu_custom_call.1} parent=1 // pred_region
      %92 = dma.done [#allocation7], 512
    $region41: #{tpu_custom_call.1} parent=1 // pred_fallthru
      _
    // Predicated region
    $region42: #{tpu_custom_call.1} parent=1 // pred_check
      _
    $region43: #{tpu_custom_call.1} parent=1 // pred_check_branch
      %94 = sbr.rel (0) target = $region45
    $region44: #{tpu_custom_call.1} parent=1 // pred_region
      %95 = dma.done [#allocation10], 512
    $region45: #{tpu_custom_call.1} parent=1 // pred_fallthru
      _
    // Predicated region
    $region46: #{tpu_custom_call.1} parent=1 // pred_check
      _
    $region47: #{tpu_custom_call.1} parent=1 // pred_check_branch
      %97 = sbr.rel (0) target = $region49
    $region48: #{tpu_custom_call.1} parent=1 // pred_region
      %98 = dma.done [#allocation10], 512
    $region49: #{tpu_custom_call.1} parent=1 // pred_fallthru
      _
    %v99 = vld [vmem:[#allocation3] sm:$0x3]
    %v100 = vld [vmem:[#allocation3 + $0x2] sm:$0x3]
    %v101 = vld [vmem:[#allocation3 + $0x4] sm:$0x3]
    %v102 = vld [vmem:[#allocation3 + $0x6] sm:$0x3]
    %v103 = vld [vmem:[#allocation3 + $0x8] sm:$0x3]
    %v104 = vld [vmem:[#allocation3 + $0xa] sm:$0x3]
    %v105 = vld [vmem:[#allocation3 + $0xc] sm:$0x3]
    %v106 = vld [vmem:[#allocation3 + $0xe] sm:$0x3]
    %v107 = vld [vmem:[#allocation6] sm:$0xff]
    %v108 = vld [vmem:[#allocation6 + $0x8] sm:$0xff]
    %v109 = vld [vmem:[#allocation9] sm:$0xff]
    %v110 = vld [vmem:[#allocation9 + $0x8] sm:$0xff]
    %v111 = vld [vmem:[#allocation9 + $0x10] sm:$0xff]
    %v112 = vld [vmem:[#allocation9 + $0x18] sm:$0xff]
    %v113 = vld [vmem:[%s5] sm:$0x1]
    %v115 = vlaneseq
    %v116 = vshrl.u32 %v115, 7
    %v117 = vsub.s32 0, %v116
    %v118 = vrot.slane %v113, %v117
    %v128 = vcombine.low %v99, %v100
    %v129 = vcombine.low %v101, %v102
    %v131 = vunpack.c.l.s4 1983009808
    %v132 = vunpack.c.0.s8 %v131
    %v133 = vlaneseq
    %v134 = vshrl.u32 %v133, 7
    %v135 = vsub.s32 %v132, %v134
    %v136 = vrot.slane %v128, %v135
    %v138 = vunpack.c.l.s4 1983009808
    %v139 = vunpack.c.0.s8 %v138
    %v140 = vlaneseq
    %v141 = vshrl.u32 %v140, 7
    %v142 = vsub.s32 %v139, %v141
    %v143 = vrot.slane %v129, %v142
    %v144 = vcombine.low %v136, %v143
    %v145 = vcombine.low %v103, %v104
    %v146 = vcombine.low %v105, %v106
    %v148 = vunpack.c.l.s4 1983009808
    %v149 = vunpack.c.0.s8 %v148
    %v150 = vlaneseq
    %v151 = vshrl.u32 %v150, 7
    %v152 = vsub.s32 %v149, %v151
    %v153 = vrot.slane %v145, %v152
    %v155 = vunpack.c.l.s4 1983009808
    %v156 = vunpack.c.0.s8 %v155
    %v157 = vlaneseq
    %v158 = vshrl.u32 %v157, 7
    %v159 = vsub.s32 %v156, %v158
    %v160 = vrot.slane %v146, %v159
    %v161 = vcombine.low %v153, %v160
    %vm162 = vcmask 130048
    %v163 = vsel %vm162, %v144, 0
    %v165 = vsel %vm162, %v161, 0
    %167 = vmatprep.subr.mxu0 0.0
    %168 = vmatpush1.msra.mxu0 %v107
    %169 = vmatprep.subr.mxu0 0.0
    %170 = vmatpush1.msra.mxu0 %v108
    %171 = vmatprep.subr.mxu0 0.0
    %172 = vmatpush1.msra.mxu0 0.0
    %173 = vmatprep.subr.mxu0 0.0
    %174 = vmatpush1.msra.mxu0 0.0
    %175 = vmatprep.subr.mxu0 0.0
    %176 = vmatpush1.msra.mxu0 0.0
    %177 = vmatprep.subr.mxu0 0.0
    %178 = vmatpush1.msra.mxu0 0.0
    %179 = vmatprep.subr.mxu0 0.0
    %180 = vmatpush1.msra.mxu0 0.0
    %181 = vmatprep.subr.mxu0 0.0
    %182 = vmatpush1.msra.mxu0 0.0
    %183 = vmatprep.subr.mxu0 0.0
    %184 = vmatpush1.msra.mxu0 0.0
    %185 = vmatprep.subr.mxu0 0.0
    %186 = vmatpush1.msra.mxu0 0.0
    %187 = vmatprep.subr.mxu0 0.0
    %188 = vmatpush1.msra.mxu0 0.0
    %189 = vmatprep.subr.mxu0 0.0
    %190 = vmatpush1.msra.mxu0 0.0
    %191 = vmatprep.subr.mxu0 0.0
    %192 = vmatpush1.msra.mxu0 0.0
    %193 = vmatprep.subr.mxu0 0.0
    %194 = vmatpush1.msra.mxu0 0.0
    %195 = vmatprep.subr.mxu0 0.0
    %196 = vmatpush1.msra.mxu0 0.0
    %197 = vmatprep.subr.mxu0 0.0
    %198 = vmatpush1.msra.mxu0 0.0
    %199 = vmatprep.subr.mxu0 0.0
    %200 = vmatpush1.msra.mxu0 0.0
    %201 = vmatprep.subr.mxu0 0.0
    %202 = vmatpush1.msra.mxu0 0.0
    %203 = vmatprep.subr.mxu0 0.0
    %204 = vmatpush1.msra.mxu0 0.0
    %205 = vmatprep.subr.mxu0 0.0
    %206 = vmatpush1.msra.mxu0 0.0
    %207 = vmatprep.subr.mxu0 0.0
    %208 = vmatpush1.msra.mxu0 0.0
    %209 = vmatprep.subr.mxu0 0.0
    %210 = vmatpush1.msra.mxu0 0.0
    %211 = vmatprep.subr.mxu0 0.0
    %212 = vmatpush1.msra.mxu0 0.0
    %213 = vmatprep.subr.mxu0 0.0
    %214 = vmatpush1.msra.mxu0 0.0
    %215 = vmatprep.subr.mxu0 0.0
    %216 = vmatpush1.msra.mxu0 0.0
    %217 = vmatprep.subr.mxu0 0.0
    %218 = vmatpush1.msra.mxu0 0.0
    %219 = vmatprep.subr.mxu0 0.0
    %220 = vmatpush1.msra.mxu0 0.0
    %221 = vmatprep.subr.mxu0 0.0
    %222 = vmatpush1.msra.mxu0 0.0
    %223 = vmatprep.subr.mxu0 0.0
    %224 = vmatpush1.msra.mxu0 0.0
    %225 = vmatprep.subr.mxu0 0.0
    %226 = vmatpush1.msra.mxu0 0.0
    %227 = vmatprep.subr.mxu0 0.0
    %228 = vmatpush1.msra.mxu0 0.0
    %229 = vmatprep.subr.mxu0 0.0
    %230 = vmatpush1.msra.mxu0 0.0
    %231 = vmatprep.mubr.f32.mxu0 0.0
    %232 = vmatmul.mubr.f32.gmra.mrb[0].mxu0 %v163
    %v233 = vpop.f32.mrb[0].mxu0
    %v234 = vadd.f32 %v118, %v233
    %v235 = vpop.f32.mrb[0].mxu0
    %236 = vmatprep.mubr.f32.mxu0 0.0
    %237 = vmatmul.mubr.f32.gmra.mrb[0].mxu0 %v165
    %v238 = vpop.f32.mrb[0].mxu0
    %v239 = vadd.f32 %v118, %v238
    %v240 = vpop.f32.mrb[0].mxu0
    %241 = vdwg.mxu0
    %vm242 = vcmask 261120
    %v244 = vsel %vm242, 0.0, 0
    %246 = vmatprep.subr.mxu0 0.0
    %247 = vmatpush1.msra.mxu0 %v109
    %248 = vmatprep.subr.mxu0 0.0
    %249 = vmatpush1.msra.mxu0 %v110
    %250 = vmatprep.subr.mxu0 0.0
    %251 = vmatpush1.msra.mxu0 %v111
    %252 = vmatprep.subr.mxu0 0.0
    %253 = vmatpush1.msra.mxu0 %v112
    %254 = vmatprep.subr.mxu0 0.0
    %255 = vmatpush1.msra.mxu0 0.0
    %256 = vmatprep.subr.mxu0 0.0
    %257 = vmatpush1.msra.mxu0 0.0
    %258 = vmatprep.subr.mxu0 0.0
    %259 = vmatpush1.msra.mxu0 0.0
    %260 = vmatprep.subr.mxu0 0.0
    %261 = vmatpush1.msra.mxu0 0.0
    %262 = vmatprep.subr.mxu0 0.0
    %263 = vmatpush1.msra.mxu0 0.0
    %264 = vmatprep.subr.mxu0 0.0
    %265 = vmatpush1.msra.mxu0 0.0
    %266 = vmatprep.subr.mxu0 0.0
    %267 = vmatpush1.msra.mxu0 0.0
    %268 = vmatprep.subr.mxu0 0.0
    %269 = vmatpush1.msra.mxu0 0.0
    %270 = vmatprep.subr.mxu0 0.0
    %271 = vmatpush1.msra.mxu0 0.0
    %272 = vmatprep.subr.mxu0 0.0
    %273 = vmatpush1.msra.mxu0 0.0
    %274 = vmatprep.subr.mxu0 0.0
    %275 = vmatpush1.msra.mxu0 0.0
    %276 = vmatprep.subr.mxu0 0.0
    %277 = vmatpush1.msra.mxu0 0.0
    %278 = vmatprep.subr.mxu0 0.0
    %279 = vmatpush1.msra.mxu0 0.0
    %280 = vmatprep.subr.mxu0 0.0
    %281 = vmatpush1.msra.mxu0 0.0
    %282 = vmatprep.subr.mxu0 0.0
    %283 = vmatpush1.msra.mxu0 0.0
    %284 = vmatprep.subr.mxu0 0.0
    %285 = vmatpush1.msra.mxu0 0.0
    %286 = vmatprep.subr.mxu0 0.0
    %287 = vmatpush1.msra.mxu0 0.0
    %288 = vmatprep.subr.mxu0 0.0
    %289 = vmatpush1.msra.mxu0 0.0
    %290 = vmatprep.subr.mxu0 0.0
    %291 = vmatpush1.msra.mxu0 0.0
    %292 = vmatprep.subr.mxu0 0.0
    %293 = vmatpush1.msra.mxu0 0.0
    %294 = vmatprep.subr.mxu0 0.0
    %295 = vmatpush1.msra.mxu0 0.0
    %296 = vmatprep.subr.mxu0 0.0
    %297 = vmatpush1.msra.mxu0 0.0
    %298 = vmatprep.subr.mxu0 0.0
    %299 = vmatpush1.msra.mxu0 0.0
    %300 = vmatprep.subr.mxu0 0.0
    %301 = vmatpush1.msra.mxu0 0.0
    %302 = vmatprep.subr.mxu0 0.0
    %303 = vmatpush1.msra.mxu0 0.0
    %304 = vmatprep.subr.mxu0 0.0
    %305 = vmatpush1.msra.mxu0 0.0
    %306 = vmatprep.subr.mxu0 0.0
    %307 = vmatpush1.msra.mxu0 0.0
    %308 = vmatprep.subr.mxu0 0.0
    %309 = vmatpush1.msra.mxu0 0.0
    %310 = vmatprep.mubr.f32.mxu0 0.0
    %311 = vmatmul.mubr.f32.gmra.mrb[0].mxu0 %v244
    %v312 = vpop.f32.mrb[0].mxu0
    %v313 = vadd.f32 0.0, %v312
    %v314 = vpop.f32.mrb[0].mxu0
    %315 = vdwg.mxu0
    %v316 = vadd.f32 %v234, %v313
    %v317 = vxor.u32 %v316, 2147483648
    %v318 = vmul.f32 %v317, 1.442695
    %v319 = vpow.pop %v318
    %v320 = vadd.f32 %v319, 1.0
    %v321 = vrcp.pop %v320
    %v322 = vmul.f32 1.0, %v321
    %v323 = vmul.f32 %v322, 2.0
    %v324 = vsub.f32 %v323, 1.0
    %v325 = vmul.f32 %v322, 0.0
    %327 = vrot.lane.b32.xlu0 %v324, 64
    %v328 = vpop.permute.xlu0 %327
    %v330 = vmul.f32 %v322, %v328
    %332 = vrot.lane.b32.xlu0 %v330, 32
    %v333 = vpop.permute.xlu0 %332
    %v335 = vadd.f32 %v325, %v333
    %v336 = vtanh.pop %v335
    %338 = vrot.lane.b32.xlu0 %v336, 64
    %v339 = vpop.permute.xlu0 %338
    %v341 = vmul.f32 %v322, %v339
    %343 = vrot.lane.b32.xlu0 %v341, 32
    %v344 = vpop.permute.xlu0 %343
    %vm346 = vcmask 254976
    %347 = vst.msk [vmem:[#allocation2] sm:$0x3] %vm346, %v344
    %v348 = vsel %vm242, %v344, 0
    %350 = vmatprep.subr.mxu0 0.0
    %351 = vmatpush1.msra.mxu0 %v109
    %352 = vmatprep.subr.mxu0 0.0
    %353 = vmatpush1.msra.mxu0 %v110
    %354 = vmatprep.subr.mxu0 0.0
    %355 = vmatpush1.msra.mxu0 %v111
    %356 = vmatprep.subr.mxu0 0.0
    %357 = vmatpush1.msra.mxu0 %v112
    %358 = vmatprep.subr.mxu0 0.0
    %359 = vmatpush1.msra.mxu0 0.0
    %360 = vmatprep.subr.mxu0 0.0
    %361 = vmatpush1.msra.mxu0 0.0
    %362 = vmatprep.subr.mxu0 0.0
    %363 = vmatpush1.msra.mxu0 0.0
    %364 = vmatprep.subr.mxu0 0.0
    %365 = vmatpush1.msra.mxu0 0.0
    %366 = vmatprep.subr.mxu0 0.0
    %367 = vmatpush1.msra.mxu0 0.0
    %368 = vmatprep.subr.mxu0 0.0
    %369 = vmatpush1.msra.mxu0 0.0
    %370 = vmatprep.subr.mxu0 0.0
    %371 = vmatpush1.msra.mxu0 0.0
    %372 = vmatprep.subr.mxu0 0.0
    %373 = vmatpush1.msra.mxu0 0.0
    %374 = vmatprep.subr.mxu0 0.0
    %375 = vmatpush1.msra.mxu0 0.0
    %376 = vmatprep.subr.mxu0 0.0
    %377 = vmatpush1.msra.mxu0 0.0
    %378 = vmatprep.subr.mxu0 0.0
    %379 = vmatpush1.msra.mxu0 0.0
    %380 = vmatprep.subr.mxu0 0.0
    %381 = vmatpush1.msra.mxu0 0.0
    %382 = vmatprep.subr.mxu0 0.0
    %383 = vmatpush1.msra.mxu0 0.0
    %384 = vmatprep.subr.mxu0 0.0
    %385 = vmatpush1.msra.mxu0 0.0
    %386 = vmatprep.subr.mxu0 0.0
    %387 = vmatpush1.msra.mxu0 0.0
    %388 = vmatprep.subr.mxu0 0.0
    %389 = vmatpush1.msra.mxu0 0.0
    %390 = vmatprep.subr.mxu0 0.0
    %391 = vmatpush1.msra.mxu0 0.0
    %392 = vmatprep.subr.mxu0 0.0
    %393 = vmatpush1.msra.mxu0 0.0
    %394 = vmatprep.subr.mxu0 0.0
    %395 = vmatpush1.msra.mxu0 0.0
    %396 = vmatprep.subr.mxu0 0.0
    %397 = vmatpush1.msra.mxu0 0.0
    %398 = vmatprep.subr.mxu0 0.0
    %399 = vmatpush1.msra.mxu0 0.0
    %400 = vmatprep.subr.mxu0 0.0
    %401 = vmatpush1.msra.mxu0 0.0
    %402 = vmatprep.subr.mxu0 0.0
    %403 = vmatpush1.msra.mxu0 0.0
    %404 = vmatprep.subr.mxu0 0.0
    %405 = vmatpush1.msra.mxu0 0.0
    %406 = vmatprep.subr.mxu0 0.0
    %407 = vmatpush1.msra.mxu0 0.0
    %408 = vmatprep.subr.mxu0 0.0
    %409 = vmatpush1.msra.mxu0 0.0
    %410 = vmatprep.subr.mxu0 0.0
    %411 = vmatpush1.msra.mxu0 0.0
    %412 = vmatprep.subr.mxu0 0.0
    %413 = vmatpush1.msra.mxu0 0.0
    %414 = vmatprep.mubr.f32.mxu0 0.0
    %415 = vmatmul.mubr.f32.gmra.mrb[0].mxu0 %v348
    %v416 = vpop.f32.mrb[0].mxu0
    %v417 = vadd.f32 0.0, %v416
    %v418 = vpop.f32.mrb[0].mxu0
    %419 = vdwg.mxu0
    %v421 = vrot.slane %v417, 6
    %v423 = vadd.f32 %v234, %v421
    %v424 = vxor.u32 %v423, 2147483648
    %v425 = vmul.f32 %v424, 1.442695
    %v426 = vpow.pop %v425
    %v427 = vadd.f32 %v426, 1.0
    %v428 = vrcp.pop %v427
    %v429 = vmul.f32 1.0, %v428
    %v430 = vmul.f32 %v429, 2.0
    %v431 = vsub.f32 %v430, 1.0
    %v433 = vrot.slane %v335, 6
    %v435 = vmul.f32 %v429, %v433
    %437 = vrot.lane.b32.xlu0 %v431, 64
    %v438 = vpop.permute.xlu0 %437
    %v440 = vmul.f32 %v429, %v438
    %442 = vrot.lane.b32.xlu0 %v440, 32
    %v443 = vpop.permute.xlu0 %442
    %v445 = vadd.f32 %v435, %v443
    %v446 = vtanh.pop %v445
    %448 = vrot.lane.b32.xlu0 %v446, 64
    %v449 = vpop.permute.xlu0 %448
    %v451 = vmul.f32 %v429, %v449
    %453 = vrot.lane.b32.xlu0 %v451, 32
    %v454 = vpop.permute.xlu0 %453
    %s456 = scalar_lea.vmem [#allocation2], 2
    %vm457 = vcmask 257026
    %458 = vst.msk [vmem:[%s456 - $0x2] sm:$0xc] %vm457, %v454
    %v459 = vrot.slane %v451, 2
    %460 = vrot.lane.b32.xlu0 %v459, 32
    %v461 = vpop.permute.xlu0 %460
    %v462 = vsel %vm242, %v461, 0
    %464 = vmatprep.subr.mxu0 0.0
    %465 = vmatpush1.msra.mxu0 %v109
    %466 = vmatprep.subr.mxu0 0.0
    %467 = vmatpush1.msra.mxu0 %v110
    %468 = vmatprep.subr.mxu0 0.0
    %469 = vmatpush1.msra.mxu0 %v111
    %470 = vmatprep.subr.mxu0 0.0
    %471 = vmatpush1.msra.mxu0 %v112
    %472 = vmatprep.subr.mxu0 0.0
    %473 = vmatpush1.msra.mxu0 0.0
    %474 = vmatprep.subr.mxu0 0.0
    %475 = vmatpush1.msra.mxu0 0.0
    %476 = vmatprep.subr.mxu0 0.0
    %477 = vmatpush1.msra.mxu0 0.0
    %478 = vmatprep.subr.mxu0 0.0
    %479 = vmatpush1.msra.mxu0 0.0
    %480 = vmatprep.subr.mxu0 0.0
    %481 = vmatpush1.msra.mxu0 0.0
    %482 = vmatprep.subr.mxu0 0.0
    %483 = vmatpush1.msra.mxu0 0.0
    %484 = vmatprep.subr.mxu0 0.0
    %485 = vmatpush1.msra.mxu0 0.0
    %486 = vmatprep.subr.mxu0 0.0
    %487 = vmatpush1.msra.mxu0 0.0
    %488 = vmatprep.subr.mxu0 0.0
    %489 = vmatpush1.msra.mxu0 0.0
    %490 = vmatprep.subr.mxu0 0.0
    %491 = vmatpush1.msra.mxu0 0.0
    %492 = vmatprep.subr.mxu0 0.0
    %493 = vmatpush1.msra.mxu0 0.0
    %494 = vmatprep.subr.mxu0 0.0
    %495 = vmatpush1.msra.mxu0 0.0
    %496 = vmatprep.subr.mxu0 0.0
    %497 = vmatpush1.msra.mxu0 0.0
    %498 = vmatprep.subr.mxu0 0.0
    %499 = vmatpush1.msra.mxu0 0.0
    %500 = vmatprep.subr.mxu0 0.0
    %501 = vmatpush1.msra.mxu0 0.0
    %502 = vmatprep.subr.mxu0 0.0
    %503 = vmatpush1.msra.mxu0 0.0
    %504 = vmatprep.subr.mxu0 0.0
    %505 = vmatpush1.msra.mxu0 0.0
    %506 = vmatprep.subr.mxu0 0.0
    %507 = vmatpush1.msra.mxu0 0.0
    %508 = vmatprep.subr.mxu0 0.0
    %509 = vmatpush1.msra.mxu0 0.0
    %510 = vmatprep.subr.mxu0 0.0
    %511 = vmatpush1.msra.mxu0 0.0
    %512 = vmatprep.subr.mxu0 0.0
    %513 = vmatpush1.msra.mxu0 0.0
    %514 = vmatprep.subr.mxu0 0.0
    %515 = vmatpush1.msra.mxu0 0.0
    %516 = vmatprep.subr.mxu0 0.0
    %517 = vmatpush1.msra.mxu0 0.0
    %518 = vmatprep.subr.mxu0 0.0
    %519 = vmatpush1.msra.mxu0 0.0
    %520 = vmatprep.subr.mxu0 0.0
    %521 = vmatpush1.msra.mxu0 0.0
    %522 = vmatprep.subr.mxu0 0.0
    %523 = vmatpush1.msra.mxu0 0.0
    %524 = vmatprep.subr.mxu0 0.0
    %525 = vmatpush1.msra.mxu0 0.0
    %526 = vmatprep.subr.mxu0 0.0
    %527 = vmatpush1.msra.mxu0 0.0
    %528 = vmatprep.mubr.f32.mxu0 0.0
    %529 = vmatmul.mubr.f32.gmra.mrb[0].mxu0 %v462
    %v530 = vpop.f32.mrb[0].mxu0
    %v531 = vadd.f32 0.0, %v530
    %v532 = vpop.f32.mrb[0].mxu0
    %533 = vdwg.mxu0
    %v535 = vrot.slane %v531, 4
    %v537 = vadd.f32 %v234, %v535
    %v538 = vxor.u32 %v537, 2147483648
    %v539 = vmul.f32 %v538, 1.442695
    %v540 = vpow.pop %v539
    %v541 = vadd.f32 %v540, 1.0
    %v542 = vrcp.pop %v541
    %v543 = vmul.f32 1.0, %v542
    %v544 = vmul.f32 %v543, 2.0
    %v545 = vsub.f32 %v544, 1.0
    %v547 = vrot.slane %v445, 6
    %v549 = vmul.f32 %v543, %v547
    %551 = vrot.lane.b32.xlu0 %v545, 64
    %v552 = vpop.permute.xlu0 %551
    %v554 = vmul.f32 %v543, %v552
    %556 = vrot.lane.b32.xlu0 %v554, 32
    %v557 = vpop.permute.xlu0 %556
    %v559 = vadd.f32 %v549, %v557
    %v560 = vtanh.pop %v559
    %562 = vrot.lane.b32.xlu0 %v560, 64
    %v563 = vpop.permute.xlu0 %562
    %v565 = vmul.f32 %v543, %v563
    %567 = vrot.lane.b32.xlu0 %v565, 32
    %v568 = vpop.permute.xlu0 %567
    %s570 = scalar_lea.vmem [#allocation2], 4
    %vm571 = vcmask 259076
    %572 = vst.msk [vmem:[%s570 - $0x4] sm:$0x30] %vm571, %v568
    %v573 = vrot.slane %v565, 4
    %574 = vrot.lane.b32.xlu0 %v573, 32
    %v575 = vpop.permute.xlu0 %574
    %v576 = vsel %vm242, %v575, 0
    %578 = vmatprep.subr.mxu0 0.0
    %579 = vmatpush1.msra.mxu0 %v109
    %580 = vmatprep.subr.mxu0 0.0
    %581 = vmatpush1.msra.mxu0 %v110
    %582 = vmatprep.subr.mxu0 0.0
    %583 = vmatpush1.msra.mxu0 %v111
    %584 = vmatprep.subr.mxu0 0.0
    %585 = vmatpush1.msra.mxu0 %v112
    %586 = vmatprep.subr.mxu0 0.0
    %587 = vmatpush1.msra.mxu0 0.0
    %588 = vmatprep.subr.mxu0 0.0
    %589 = vmatpush1.msra.mxu0 0.0
    %590 = vmatprep.subr.mxu0 0.0
    %591 = vmatpush1.msra.mxu0 0.0
    %592 = vmatprep.subr.mxu0 0.0
    %593 = vmatpush1.msra.mxu0 0.0
    %594 = vmatprep.subr.mxu0 0.0
    %595 = vmatpush1.msra.mxu0 0.0
    %596 = vmatprep.subr.mxu0 0.0
    %597 = vmatpush1.msra.mxu0 0.0
    %598 = vmatprep.subr.mxu0 0.0
    %599 = vmatpush1.msra.mxu0 0.0
    %600 = vmatprep.subr.mxu0 0.0
    %601 = vmatpush1.msra.mxu0 0.0
    %602 = vmatprep.subr.mxu0 0.0
    %603 = vmatpush1.msra.mxu0 0.0
    %604 = vmatprep.subr.mxu0 0.0
    %605 = vmatpush1.msra.mxu0 0.0
    %606 = vmatprep.subr.mxu0 0.0
    %607 = vmatpush1.msra.mxu0 0.0
    %608 = vmatprep.subr.mxu0 0.0
    %609 = vmatpush1.msra.mxu0 0.0
    %610 = vmatprep.subr.mxu0 0.0
    %611 = vmatpush1.msra.mxu0 0.0
    %612 = vmatprep.subr.mxu0 0.0
    %613 = vmatpush1.msra.mxu0 0.0
    %614 = vmatprep.subr.mxu0 0.0
    %615 = vmatpush1.msra.mxu0 0.0
    %616 = vmatprep.subr.mxu0 0.0
    %617 = vmatpush1.msra.mxu0 0.0
    %618 = vmatprep.subr.mxu0 0.0
    %619 = vmatpush1.msra.mxu0 0.0
    %620 = vmatprep.subr.mxu0 0.0
    %621 = vmatpush1.msra.mxu0 0.0
    %622 = vmatprep.subr.mxu0 0.0
    %623 = vmatpush1.msra.mxu0 0.0
    %624 = vmatprep.subr.mxu0 0.0
    %625 = vmatpush1.msra.mxu0 0.0
    %626 = vmatprep.subr.mxu0 0.0
    %627 = vmatpush1.msra.mxu0 0.0
    %628 = vmatprep.subr.mxu0 0.0
    %629 = vmatpush1.msra.mxu0 0.0
    %630 = vmatprep.subr.mxu0 0.0
    %631 = vmatpush1.msra.mxu0 0.0
    %632 = vmatprep.subr.mxu0 0.0
    %633 = vmatpush1.msra.mxu0 0.0
    %634 = vmatprep.subr.mxu0 0.0
    %635 = vmatpush1.msra.mxu0 0.0
    %636 = vmatprep.subr.mxu0 0.0
    %637 = vmatpush1.msra.mxu0 0.0
    %638 = vmatprep.subr.mxu0 0.0
    %639 = vmatpush1.msra.mxu0 0.0
    %640 = vmatprep.subr.mxu0 0.0
    %641 = vmatpush1.msra.mxu0 0.0
    %642 = vmatprep.mubr.f32.mxu0 0.0
    %643 = vmatmul.mubr.f32.gmra.mrb[0].mxu0 %v576
    %v644 = vpop.f32.mrb[0].mxu0
    %v645 = vadd.f32 0.0, %v644
    %v646 = vpop.f32.mrb[0].mxu0
    %647 = vdwg.mxu0
    %v649 = vrot.slane %v645, 2
    %v651 = vadd.f32 %v234, %v649
    %v652 = vxor.u32 %v651, 2147483648
    %v653 = vmul.f32 %v652, 1.442695
    %v654 = vpow.pop %v653
    %v655 = vadd.f32 %v654, 1.0
    %v656 = vrcp.pop %v655
    %v657 = vmul.f32 1.0, %v656
    %v658 = vmul.f32 %v657, 2.0
    %v659 = vsub.f32 %v658, 1.0
    %v661 = vrot.slane %v559, 6
    %v663 = vmul.f32 %v657, %v661
    %665 = vrot.lane.b32.xlu0 %v659, 64
    %v666 = vpop.permute.xlu0 %665
    %v668 = vmul.f32 %v657, %v666
    %670 = vrot.lane.b32.xlu0 %v668, 32
    %v671 = vpop.permute.xlu0 %670
    %v673 = vadd.f32 %v663, %v671
    %v674 = vtanh.pop %v673
    %676 = vrot.lane.b32.xlu0 %v674, 64
    %v677 = vpop.permute.xlu0 %676
    %v679 = vmul.f32 %v657, %v677
    %681 = vrot.lane.b32.xlu0 %v679, 32
    %v682 = vpop.permute.xlu0 %681
    %s684 = scalar_lea.vmem [#allocation2], 6
    %vm685 = vcmask 261126
    %686 = vst.msk [vmem:[%s684 - $0x6] sm:$0xc0] %vm685, %v682
    %v687 = vrot.slane %v679, 6
    %688 = vrot.lane.b32.xlu0 %v687, 32
    %v689 = vpop.permute.xlu0 %688
    %v690 = vsel %vm242, %v689, 0
    %692 = vmatprep.subr.mxu0 0.0
    %693 = vmatpush1.msra.mxu0 %v109
    %694 = vmatprep.subr.mxu0 0.0
    %695 = vmatpush1.msra.mxu0 %v110
    %696 = vmatprep.subr.mxu0 0.0
    %697 = vmatpush1.msra.mxu0 %v111
    %698 = vmatprep.subr.mxu0 0.0
    %699 = vmatpush1.msra.mxu0 %v112
    %700 = vmatprep.subr.mxu0 0.0
    %701 = vmatpush1.msra.mxu0 0.0
    %702 = vmatprep.subr.mxu0 0.0
    %703 = vmatpush1.msra.mxu0 0.0
    %704 = vmatprep.subr.mxu0 0.0
    %705 = vmatpush1.msra.mxu0 0.0
    %706 = vmatprep.subr.mxu0 0.0
    %707 = vmatpush1.msra.mxu0 0.0
    %708 = vmatprep.subr.mxu0 0.0
    %709 = vmatpush1.msra.mxu0 0.0
    %710 = vmatprep.subr.mxu0 0.0
    %711 = vmatpush1.msra.mxu0 0.0
    %712 = vmatprep.subr.mxu0 0.0
    %713 = vmatpush1.msra.mxu0 0.0
    %714 = vmatprep.subr.mxu0 0.0
    %715 = vmatpush1.msra.mxu0 0.0
    %716 = vmatprep.subr.mxu0 0.0
    %717 = vmatpush1.msra.mxu0 0.0
    %718 = vmatprep.subr.mxu0 0.0
    %719 = vmatpush1.msra.mxu0 0.0
    %720 = vmatprep.subr.mxu0 0.0
    %721 = vmatpush1.msra.mxu0 0.0
    %722 = vmatprep.subr.mxu0 0.0
    %723 = vmatpush1.msra.mxu0 0.0
    %724 = vmatprep.subr.mxu0 0.0
    %725 = vmatpush1.msra.mxu0 0.0
    %726 = vmatprep.subr.mxu0 0.0
    %727 = vmatpush1.msra.mxu0 0.0
    %728 = vmatprep.subr.mxu0 0.0
    %729 = vmatpush1.msra.mxu0 0.0
    %730 = vmatprep.subr.mxu0 0.0
    %731 = vmatpush1.msra.mxu0 0.0
    %732 = vmatprep.subr.mxu0 0.0
    %733 = vmatpush1.msra.mxu0 0.0
    %734 = vmatprep.subr.mxu0 0.0
    %735 = vmatpush1.msra.mxu0 0.0
    %736 = vmatprep.subr.mxu0 0.0
    %737 = vmatpush1.msra.mxu0 0.0
    %738 = vmatprep.subr.mxu0 0.0
    %739 = vmatpush1.msra.mxu0 0.0
    %740 = vmatprep.subr.mxu0 0.0
    %741 = vmatpush1.msra.mxu0 0.0
    %742 = vmatprep.subr.mxu0 0.0
    %743 = vmatpush1.msra.mxu0 0.0
    %744 = vmatprep.subr.mxu0 0.0
    %745 = vmatpush1.msra.mxu0 0.0
    %746 = vmatprep.subr.mxu0 0.0
    %747 = vmatpush1.msra.mxu0 0.0
    %748 = vmatprep.subr.mxu0 0.0
    %749 = vmatpush1.msra.mxu0 0.0
    %750 = vmatprep.subr.mxu0 0.0
    %751 = vmatpush1.msra.mxu0 0.0
    %752 = vmatprep.subr.mxu0 0.0
    %753 = vmatpush1.msra.mxu0 0.0
    %754 = vmatprep.subr.mxu0 0.0
    %755 = vmatpush1.msra.mxu0 0.0
    %756 = vmatprep.mubr.f32.mxu0 0.0
    %757 = vmatmul.mubr.f32.gmra.mrb[0].mxu0 %v690
    %v758 = vpop.f32.mrb[0].mxu0
    %v759 = vadd.f32 0.0, %v758
    %v760 = vpop.f32.mrb[0].mxu0
    %761 = vdwg.mxu0
    %v762 = vadd.f32 %v239, %v759
    %v763 = vxor.u32 %v762, 2147483648
    %v764 = vmul.f32 %v763, 1.442695
    %v765 = vpow.pop %v764
    %v766 = vadd.f32 %v765, 1.0
    %v767 = vrcp.pop %v766
    %v768 = vmul.f32 1.0, %v767
    %v769 = vmul.f32 %v768, 2.0
    %v770 = vsub.f32 %v769, 1.0
    %v772 = vrot.slane %v673, 6
    %v774 = vmul.f32 %v768, %v772
    %776 = vrot.lane.b32.xlu0 %v770, 64
    %v777 = vpop.permute.xlu0 %776
    %v779 = vmul.f32 %v768, %v777
    %781 = vrot.lane.b32.xlu0 %v779, 32
    %v782 = vpop.permute.xlu0 %781
    %v784 = vadd.f32 %v774, %v782
    %v785 = vtanh.pop %v784
    %787 = vrot.lane.b32.xlu0 %v785, 64
    %v788 = vpop.permute.xlu0 %787
    %v790 = vmul.f32 %v768, %v788
    %792 = vrot.lane.b32.xlu0 %v790, 32
    %v793 = vpop.permute.xlu0 %792
    %s795 = scalar_lea.vmem [#allocation2], 8
    %796 = vst.msk [vmem:[%s795] sm:$0x3] %vm346, %v793
    %v797 = vsel %vm242, %v793, 0
    %799 = vmatprep.subr.mxu0 0.0
    %800 = vmatpush1.msra.mxu0 %v109
    %801 = vmatprep.subr.mxu0 0.0
    %802 = vmatpush1.msra.mxu0 %v110
    %803 = vmatprep.subr.mxu0 0.0
    %804 = vmatpush1.msra.mxu0 %v111
    %805 = vmatprep.subr.mxu0 0.0
    %806 = vmatpush1.msra.mxu0 %v112
    %807 = vmatprep.subr.mxu0 0.0
    %808 = vmatpush1.msra.mxu0 0.0
    %809 = vmatprep.subr.mxu0 0.0
    %810 = vmatpush1.msra.mxu0 0.0
    %811 = vmatprep.subr.mxu0 0.0
    %812 = vmatpush1.msra.mxu0 0.0
    %813 = vmatprep.subr.mxu0 0.0
    %814 = vmatpush1.msra.mxu0 0.0
    %815 = vmatprep.subr.mxu0 0.0
    %816 = vmatpush1.msra.mxu0 0.0
    %817 = vmatprep.subr.mxu0 0.0
    %818 = vmatpush1.msra.mxu0 0.0
    %819 = vmatprep.subr.mxu0 0.0
    %820 = vmatpush1.msra.mxu0 0.0
    %821 = vmatprep.subr.mxu0 0.0
    %822 = vmatpush1.msra.mxu0 0.0
    %823 = vmatprep.subr.mxu0 0.0
    %824 = vmatpush1.msra.mxu0 0.0
    %825 = vmatprep.subr.mxu0 0.0
    %826 = vmatpush1.msra.mxu0 0.0
    %827 = vmatprep.subr.mxu0 0.0
    %828 = vmatpush1.msra.mxu0 0.0
    %829 = vmatprep.subr.mxu0 0.0
    %830 = vmatpush1.msra.mxu0 0.0
    %831 = vmatprep.subr.mxu0 0.0
    %832 = vmatpush1.msra.mxu0 0.0
    %833 = vmatprep.subr.mxu0 0.0
    %834 = vmatpush1.msra.mxu0 0.0
    %835 = vmatprep.subr.mxu0 0.0
    %836 = vmatpush1.msra.mxu0 0.0
    %837 = vmatprep.subr.mxu0 0.0
    %838 = vmatpush1.msra.mxu0 0.0
    %839 = vmatprep.subr.mxu0 0.0
    %840 = vmatpush1.msra.mxu0 0.0
    %841 = vmatprep.subr.mxu0 0.0
    %842 = vmatpush1.msra.mxu0 0.0
    %843 = vmatprep.subr.mxu0 0.0
    %844 = vmatpush1.msra.mxu0 0.0
    %845 = vmatprep.subr.mxu0 0.0
    %846 = vmatpush1.msra.mxu0 0.0
    %847 = vmatprep.subr.mxu0 0.0
    %848 = vmatpush1.msra.mxu0 0.0
    %849 = vmatprep.subr.mxu0 0.0
    %850 = vmatpush1.msra.mxu0 0.0
    %851 = vmatprep.subr.mxu0 0.0
    %852 = vmatpush1.msra.mxu0 0.0
    %853 = vmatprep.subr.mxu0 0.0
    %854 = vmatpush1.msra.mxu0 0.0
    %855 = vmatprep.subr.mxu0 0.0
    %856 = vmatpush1.msra.mxu0 0.0
    %857 = vmatprep.subr.mxu0 0.0
    %858 = vmatpush1.msra.mxu0 0.0
    %859 = vmatprep.subr.mxu0 0.0
    %860 = vmatpush1.msra.mxu0 0.0
    %861 = vmatprep.subr.mxu0 0.0
    %862 = vmatpush1.msra.mxu0 0.0
    %863 = vmatprep.mubr.f32.mxu0 0.0
    %864 = vmatmul.mubr.f32.gmra.mrb[0].mxu0 %v797
    %v865 = vpop.f32.mrb[0].mxu0
    %v866 = vadd.f32 0.0, %v865
    %v867 = vpop.f32.mrb[0].mxu0
    %868 = vdwg.mxu0
    %v870 = vrot.slane %v866, 6
    %v872 = vadd.f32 %v239, %v870
    %v873 = vxor.u32 %v872, 2147483648
    %v874 = vmul.f32 %v873, 1.442695
    %v875 = vpow.pop %v874
    %v876 = vadd.f32 %v875, 1.0
    %v877 = vrcp.pop %v876
    %v878 = vmul.f32 1.0, %v877
    %v879 = vmul.f32 %v878, 2.0
    %v880 = vsub.f32 %v879, 1.0
    %v882 = vrot.slane %v784, 6
    %v884 = vmul.f32 %v878, %v882
    %886 = vrot.lane.b32.xlu0 %v880, 64
    %v887 = vpop.permute.xlu0 %886
    %v889 = vmul.f32 %v878, %v887
    %891 = vrot.lane.b32.xlu0 %v889, 32
    %v892 = vpop.permute.xlu0 %891
    %v894 = vadd.f32 %v884, %v892
    %v895 = vtanh.pop %v894
    %897 = vrot.lane.b32.xlu0 %v895, 64
    %v898 = vpop.permute.xlu0 %897
    %v900 = vmul.f32 %v878, %v898
    %902 = vrot.lane.b32.xlu0 %v900, 32
    %v903 = vpop.permute.xlu0 %902
    %s905 = scalar_lea.vmem [#allocation2], 10
    %906 = vst.msk [vmem:[%s905 - $0x2] sm:$0xc] %vm457, %v903
    %v907 = vrot.slane %v900, 2
    %908 = vrot.lane.b32.xlu0 %v907, 32
    %v909 = vpop.permute.xlu0 %908
    %v910 = vsel %vm242, %v909, 0
    %912 = vmatprep.subr.mxu0 0.0
    %913 = vmatpush1.msra.mxu0 %v109
    %914 = vmatprep.subr.mxu0 0.0
    %915 = vmatpush1.msra.mxu0 %v110
    %916 = vmatprep.subr.mxu0 0.0
    %917 = vmatpush1.msra.mxu0 %v111
    %918 = vmatprep.subr.mxu0 0.0
    %919 = vmatpush1.msra.mxu0 %v112
    %920 = vmatprep.subr.mxu0 0.0
    %921 = vmatpush1.msra.mxu0 0.0
    %922 = vmatprep.subr.mxu0 0.0
    %923 = vmatpush1.msra.mxu0 0.0
    %924 = vmatprep.subr.mxu0 0.0
    %925 = vmatpush1.msra.mxu0 0.0
    %926 = vmatprep.subr.mxu0 0.0
    %927 = vmatpush1.msra.mxu0 0.0
    %928 = vmatprep.subr.mxu0 0.0
    %929 = vmatpush1.msra.mxu0 0.0
    %930 = vmatprep.subr.mxu0 0.0
    %931 = vmatpush1.msra.mxu0 0.0
    %932 = vmatprep.subr.mxu0 0.0
    %933 = vmatpush1.msra.mxu0 0.0
    %934 = vmatprep.subr.mxu0 0.0
    %935 = vmatpush1.msra.mxu0 0.0
    %936 = vmatprep.subr.mxu0 0.0
    %937 = vmatpush1.msra.mxu0 0.0
    %938 = vmatprep.subr.mxu0 0.0
    %939 = vmatpush1.msra.mxu0 0.0
    %940 = vmatprep.subr.mxu0 0.0
    %941 = vmatpush1.msra.mxu0 0.0
    %942 = vmatprep.subr.mxu0 0.0
    %943 = vmatpush1.msra.mxu0 0.0
    %944 = vmatprep.subr.mxu0 0.0
    %945 = vmatpush1.msra.mxu0 0.0
    %946 = vmatprep.subr.mxu0 0.0
    %947 = vmatpush1.msra.mxu0 0.0
    %948 = vmatprep.subr.mxu0 0.0
    %949 = vmatpush1.msra.mxu0 0.0
    %950 = vmatprep.subr.mxu0 0.0
    %951 = vmatpush1.msra.mxu0 0.0
    %952 = vmatprep.subr.mxu0 0.0
    %953 = vmatpush1.msra.mxu0 0.0
    %954 = vmatprep.subr.mxu0 0.0
    %955 = vmatpush1.msra.mxu0 0.0
    %956 = vmatprep.subr.mxu0 0.0
    %957 = vmatpush1.msra.mxu0 0.0
    %958 = vmatprep.subr.mxu0 0.0
    %959 = vmatpush1.msra.mxu0 0.0
    %960 = vmatprep.subr.mxu0 0.0
    %961 = vmatpush1.msra.mxu0 0.0
    %962 = vmatprep.subr.mxu0 0.0
    %963 = vmatpush1.msra.mxu0 0.0
    %964 = vmatprep.subr.mxu0 0.0
    %965 = vmatpush1.msra.mxu0 0.0
    %966 = vmatprep.subr.mxu0 0.0
    %967 = vmatpush1.msra.mxu0 0.0
    %968 = vmatprep.subr.mxu0 0.0
    %969 = vmatpush1.msra.mxu0 0.0
    %970 = vmatprep.subr.mxu0 0.0
    %971 = vmatpush1.msra.mxu0 0.0
    %972 = vmatprep.subr.mxu0 0.0
    %973 = vmatpush1.msra.mxu0 0.0
    %974 = vmatprep.subr.mxu0 0.0
    %975 = vmatpush1.msra.mxu0 0.0
    %976 = vmatprep.mubr.f32.mxu0 0.0
    %977 = vmatmul.mubr.f32.gmra.mrb[0].mxu0 %v910
    %v978 = vpop.f32.mrb[0].mxu0
    %v979 = vadd.f32 0.0, %v978
    %v980 = vpop.f32.mrb[0].mxu0
    %981 = vdwg.mxu0
    %v983 = vrot.slane %v979, 4
    %v985 = vadd.f32 %v239, %v983
    %v986 = vxor.u32 %v985, 2147483648
    %v987 = vmul.f32 %v986, 1.442695
    %v988 = vpow.pop %v987
    %v989 = vadd.f32 %v988, 1.0
    %v990 = vrcp.pop %v989
    %v991 = vmul.f32 1.0, %v990
    %v992 = vmul.f32 %v991, 2.0
    %v993 = vsub.f32 %v992, 1.0
    %v995 = vrot.slane %v894, 6
    %v997 = vmul.f32 %v991, %v995
    %999 = vrot.lane.b32.xlu0 %v993, 64
    %v1000 = vpop.permute.xlu0 %999
    %v1002 = vmul.f32 %v991, %v1000
    %1004 = vrot.lane.b32.xlu0 %v1002, 32
    %v1005 = vpop.permute.xlu0 %1004
    %v1007 = vadd.f32 %v997, %v1005
    %v1008 = vtanh.pop %v1007
    %1010 = vrot.lane.b32.xlu0 %v1008, 64
    %v1011 = vpop.permute.xlu0 %1010
    %v1013 = vmul.f32 %v991, %v1011
    %1015 = vrot.lane.b32.xlu0 %v1013, 32
    %v1016 = vpop.permute.xlu0 %1015
    %s1018 = scalar_lea.vmem [#allocation2], 12
    %1019 = vst.msk [vmem:[%s1018 - $0x4] sm:$0x30] %vm571, %v1016
    %v1020 = vrot.slane %v1013, 4
    %1021 = vrot.lane.b32.xlu0 %v1020, 32
    %v1022 = vpop.permute.xlu0 %1021
    %v1023 = vsel %vm242, %v1022, 0
    %1025 = vmatprep.subr.mxu0 0.0
    %1026 = vmatpush1.msra.mxu0 %v109
    %1027 = vmatprep.subr.mxu0 0.0
    %1028 = vmatpush1.msra.mxu0 %v110
    %1029 = vmatprep.subr.mxu0 0.0
    %1030 = vmatpush1.msra.mxu0 %v111
    %1031 = vmatprep.subr.mxu0 0.0
    %1032 = vmatpush1.msra.mxu0 %v112
    %1033 = vmatprep.subr.mxu0 0.0
    %1034 = vmatpush1.msra.mxu0 0.0
    %1035 = vmatprep.subr.mxu0 0.0
    %1036 = vmatpush1.msra.mxu0 0.0
    %1037 = vmatprep.subr.mxu0 0.0
    %1038 = vmatpush1.msra.mxu0 0.0
    %1039 = vmatprep.subr.mxu0 0.0
    %1040 = vmatpush1.msra.mxu0 0.0
    %1041 = vmatprep.subr.mxu0 0.0
    %1042 = vmatpush1.msra.mxu0 0.0
    %1043 = vmatprep.subr.mxu0 0.0
    %1044 = vmatpush1.msra.mxu0 0.0
    %1045 = vmatprep.subr.mxu0 0.0
    %1046 = vmatpush1.msra.mxu0 0.0
    %1047 = vmatprep.subr.mxu0 0.0
    %1048 = vmatpush1.msra.mxu0 0.0
    %1049 = vmatprep.subr.mxu0 0.0
    %1050 = vmatpush1.msra.mxu0 0.0
    %1051 = vmatprep.subr.mxu0 0.0
    %1052 = vmatpush1.msra.mxu0 0.0
    %1053 = vmatprep.subr.mxu0 0.0
    %1054 = vmatpush1.msra.mxu0 0.0
    %1055 = vmatprep.subr.mxu0 0.0
    %1056 = vmatpush1.msra.mxu0 0.0
    %1057 = vmatprep.subr.mxu0 0.0
    %1058 = vmatpush1.msra.mxu0 0.0
    %1059 = vmatprep.subr.mxu0 0.0
    %1060 = vmatpush1.msra.mxu0 0.0
    %1061 = vmatprep.subr.mxu0 0.0
    %1062 = vmatpush1.msra.mxu0 0.0
    %1063 = vmatprep.subr.mxu0 0.0
    %1064 = vmatpush1.msra.mxu0 0.0
    %1065 = vmatprep.subr.mxu0 0.0
    %1066 = vmatpush1.msra.mxu0 0.0
    %1067 = vmatprep.subr.mxu0 0.0
    %1068 = vmatpush1.msra.mxu0 0.0
    %1069 = vmatprep.subr.mxu0 0.0
    %1070 = vmatpush1.msra.mxu0 0.0
    %1071 = vmatprep.subr.mxu0 0.0
    %1072 = vmatpush1.msra.mxu0 0.0
    %1073 = vmatprep.subr.mxu0 0.0
    %1074 = vmatpush1.msra.mxu0 0.0
    %1075 = vmatprep.subr.mxu0 0.0
    %1076 = vmatpush1.msra.mxu0 0.0
    %1077 = vmatprep.subr.mxu0 0.0
    %1078 = vmatpush1.msra.mxu0 0.0
    %1079 = vmatprep.subr.mxu0 0.0
    %1080 = vmatpush1.msra.mxu0 0.0
    %1081 = vmatprep.subr.mxu0 0.0
    %1082 = vmatpush1.msra.mxu0 0.0
    %1083 = vmatprep.subr.mxu0 0.0
    %1084 = vmatpush1.msra.mxu0 0.0
    %1085 = vmatprep.subr.mxu0 0.0
    %1086 = vmatpush1.msra.mxu0 0.0
    %1087 = vmatprep.subr.mxu0 0.0
    %1088 = vmatpush1.msra.mxu0 0.0
    %1089 = vmatprep.mubr.f32.mxu0 0.0
    %1090 = vmatmul.mubr.f32.gmra.mrb[0].mxu0 %v1023
    %v1091 = vpop.f32.mrb[0].mxu0
    %v1092 = vadd.f32 0.0, %v1091
    %v1093 = vpop.f32.mrb[0].mxu0
    %1094 = vdwg.mxu0
    %v1096 = vrot.slane %v1092, 2
    %v1098 = vadd.f32 %v239, %v1096
    %v1099 = vxor.u32 %v1098, 2147483648
    %v1100 = vmul.f32 %v1099, 1.442695
    %v1101 = vpow.pop %v1100
    %v1102 = vadd.f32 %v1101, 1.0
    %v1103 = vrcp.pop %v1102
    %v1104 = vmul.f32 1.0, %v1103
    %v1105 = vmul.f32 %v1104, 2.0
    %v1106 = vsub.f32 %v1105, 1.0
    %v1108 = vrot.slane %v1007, 6
    %v1110 = vmul.f32 %v1104, %v1108
    %1112 = vrot.lane.b32.xlu0 %v1106, 64
    %v1113 = vpop.permute.xlu0 %1112
    %v1115 = vmul.f32 %v1104, %v1113
    %1117 = vrot.lane.b32.xlu0 %v1115, 32
    %v1118 = vpop.permute.xlu0 %1117
    %v1120 = vadd.f32 %v1110, %v1118
    %v1121 = vtanh.pop %v1120
    %1123 = vrot.lane.b32.xlu0 %v1121, 64
    %v1124 = vpop.permute.xlu0 %1123
    %v1126 = vmul.f32 %v1104, %v1124
    %1128 = vrot.lane.b32.xlu0 %v1126, 32
    %v1129 = vpop.permute.xlu0 %1128
    %s1131 = scalar_lea.vmem [#allocation2], 14
    %1132 = vst.msk [vmem:[%s1131 - $0x6] sm:$0xc0] %vm685, %v1129
    %1133 = vst.msk [vmem:[#allocation13 - $0x6] sm:$0xc0] %vm685, %v1129
    %1135 = vrot.lane.b32.xlu0 %v1120, 96
    %v1136 = vpop.permute.xlu0 %1135
    %1138 = vst.msk [vmem:[#allocation15 - $0x6] sm:$0xc0] %vm685, %v1136
    %v1139 = vld [vmem:[#allocation2] sm:$0x3]
    %v1140 = vld [vmem:[#allocation2 + $0x2] sm:$0x3]
    %v1141 = vld [vmem:[#allocation2 + $0x4] sm:$0x3]
    %v1142 = vld [vmem:[#allocation2 + $0x6] sm:$0x3]
    %v1143 = vld [vmem:[#allocation2 + $0x8] sm:$0x3]
    %v1144 = vld [vmem:[#allocation2 + $0xa] sm:$0x3]
    %v1145 = vld [vmem:[#allocation2 + $0xc] sm:$0x3]
    %v1146 = vld [vmem:[#allocation2 + $0xe] sm:$0x3]
    %v1147 = vld [vmem:[#allocation8] sm:$0xff]
    %v1148 = vld [vmem:[#allocation8 + $0x8] sm:$0xff]
    %v1149 = vld [vmem:[#allocation8 + $0x10] sm:$0xff]
    %v1150 = vld [vmem:[#allocation8 + $0x18] sm:$0xff]
    %v1151 = vld [vmem:[#allocation11] sm:$0xff]
    %v1152 = vld [vmem:[#allocation11 + $0x8] sm:$0xff]
    %v1153 = vld [vmem:[#allocation11 + $0x10] sm:$0xff]
    %v1154 = vld [vmem:[#allocation11 + $0x18] sm:$0xff]
    %v1155 = vld [vmem:[%s6] sm:$0x1]
    %v1157 = vlaneseq
    %v1158 = vshrl.u32 %v1157, 7
    %v1159 = vsub.s32 0, %v1158
    %v1160 = vrot.slane %v1155, %v1159
    %v1170 = vcombine.low %v1139, %v1140
    %v1171 = vcombine.low %v1141, %v1142
    %v1173 = vunpack.c.l.s4 1983009808
    %v1174 = vunpack.c.0.s8 %v1173
    %v1175 = vlaneseq
    %v1176 = vshrl.u32 %v1175, 7
    %v1177 = vsub.s32 %v1174, %v1176
    %v1178 = vrot.slane %v1170, %v1177
    %v1180 = vunpack.c.l.s4 1983009808
    %v1181 = vunpack.c.0.s8 %v1180
    %v1182 = vlaneseq
    %v1183 = vshrl.u32 %v1182, 7
    %v1184 = vsub.s32 %v1181, %v1183
    %v1185 = vrot.slane %v1171, %v1184
    %v1186 = vcombine.low %v1178, %v1185
    %v1187 = vcombine.low %v1143, %v1144
    %v1188 = vcombine.low %v1145, %v1146
    %v1190 = vunpack.c.l.s4 1983009808
    %v1191 = vunpack.c.0.s8 %v1190
    %v1192 = vlaneseq
    %v1193 = vshrl.u32 %v1192, 7
    %v1194 = vsub.s32 %v1191, %v1193
    %v1195 = vrot.slane %v1187, %v1194
    %v1197 = vunpack.c.l.s4 1983009808
    %v1198 = vunpack.c.0.s8 %v1197
    %v1199 = vlaneseq
    %v1200 = vshrl.u32 %v1199, 7
    %v1201 = vsub.s32 %v1198, %v1200
    %v1202 = vrot.slane %v1188, %v1201
    %v1203 = vcombine.low %v1195, %v1202
    %v1204 = vsel %vm242, %v1186, 0
    %v1206 = vsel %vm242, %v1203, 0
    %1208 = vmatprep.subr.mxu0 0.0
    %1209 = vmatpush1.msra.mxu0 %v1147
    %1210 = vmatprep.subr.mxu0 0.0
    %1211 = vmatpush1.msra.mxu0 %v1148
    %1212 = vmatprep.subr.mxu0 0.0
    %1213 = vmatpush1.msra.mxu0 %v1149
    %1214 = vmatprep.subr.mxu0 0.0
    %1215 = vmatpush1.msra.mxu0 %v1150
    %1216 = vmatprep.subr.mxu0 0.0
    %1217 = vmatpush1.msra.mxu0 0.0
    %1218 = vmatprep.subr.mxu0 0.0
    %1219 = vmatpush1.msra.mxu0 0.0
    %1220 = vmatprep.subr.mxu0 0.0
    %1221 = vmatpush1.msra.mxu0 0.0
    %1222 = vmatprep.subr.mxu0 0.0
    %1223 = vmatpush1.msra.mxu0 0.0
    %1224 = vmatprep.subr.mxu0 0.0
    %1225 = vmatpush1.msra.mxu0 0.0
    %1226 = vmatprep.subr.mxu0 0.0
    %1227 = vmatpush1.msra.mxu0 0.0
    %1228 = vmatprep.subr.mxu0 0.0
    %1229 = vmatpush1.msra.mxu0 0.0
    %1230 = vmatprep.subr.mxu0 0.0
    %1231 = vmatpush1.msra.mxu0 0.0
    %1232 = vmatprep.subr.mxu0 0.0
    %1233 = vmatpush1.msra.mxu0 0.0
    %1234 = vmatprep.subr.mxu0 0.0
    %1235 = vmatpush1.msra.mxu0 0.0
    %1236 = vmatprep.subr.mxu0 0.0
    %1237 = vmatpush1.msra.mxu0 0.0
    %1238 = vmatprep.subr.mxu0 0.0
    %1239 = vmatpush1.msra.mxu0 0.0
    %1240 = vmatprep.subr.mxu0 0.0
    %1241 = vmatpush1.msra.mxu0 0.0
    %1242 = vmatprep.subr.mxu0 0.0
    %1243 = vmatpush1.msra.mxu0 0.0
    %1244 = vmatprep.subr.mxu0 0.0
    %1245 = vmatpush1.msra.mxu0 0.0
    %1246 = vmatprep.subr.mxu0 0.0
    %1247 = vmatpush1.msra.mxu0 0.0
    %1248 = vmatprep.subr.mxu0 0.0
    %1249 = vmatpush1.msra.mxu0 0.0
    %1250 = vmatprep.subr.mxu0 0.0
    %1251 = vmatpush1.msra.mxu0 0.0
    %1252 = vmatprep.subr.mxu0 0.0
    %1253 = vmatpush1.msra.mxu0 0.0
    %1254 = vmatprep.subr.mxu0 0.0
    %1255 = vmatpush1.msra.mxu0 0.0
    %1256 = vmatprep.subr.mxu0 0.0
    %1257 = vmatpush1.msra.mxu0 0.0
    %1258 = vmatprep.subr.mxu0 0.0
    %1259 = vmatpush1.msra.mxu0 0.0
    %1260 = vmatprep.subr.mxu0 0.0
    %1261 = vmatpush1.msra.mxu0 0.0
    %1262 = vmatprep.subr.mxu0 0.0
    %1263 = vmatpush1.msra.mxu0 0.0
    %1264 = vmatprep.subr.mxu0 0.0
    %1265 = vmatpush1.msra.mxu0 0.0
    %1266 = vmatprep.subr.mxu0 0.0
    %1267 = vmatpush1.msra.mxu0 0.0
    %1268 = vmatprep.subr.mxu0 0.0
    %1269 = vmatpush1.msra.mxu0 0.0
    %1270 = vmatprep.subr.mxu0 0.0
    %1271 = vmatpush1.msra.mxu0 0.0
    %1272 = vmatprep.mubr.f32.mxu0 0.0
    %1273 = vmatmul.mubr.f32.gmra.mrb[0].mxu0 %v1204
    %v1274 = vpop.f32.mrb[0].mxu0
    %v1275 = vadd.f32 %v1160, %v1274
    %v1276 = vpop.f32.mrb[0].mxu0
    %1277 = vmatprep.mubr.f32.mxu0 0.0
    %1278 = vmatmul.mubr.f32.gmra.mrb[0].mxu0 %v1206
    %v1279 = vpop.f32.mrb[0].mxu0
    %v1280 = vadd.f32 %v1160, %v1279
    %v1281 = vpop.f32.mrb[0].mxu0
    %1282 = vdwg.mxu0
    %1283 = vmatprep.subr.mxu0 0.0
    %1284 = vmatpush1.msra.mxu0 %v1151
    %1285 = vmatprep.subr.mxu0 0.0
    %1286 = vmatpush1.msra.mxu0 %v1152
    %1287 = vmatprep.subr.mxu0 0.0
    %1288 = vmatpush1.msra.mxu0 %v1153
    %1289 = vmatprep.subr.mxu0 0.0
    %1290 = vmatpush1.msra.mxu0 %v1154
    %1291 = vmatprep.subr.mxu0 0.0
    %1292 = vmatpush1.msra.mxu0 0.0
    %1293 = vmatprep.subr.mxu0 0.0
    %1294 = vmatpush1.msra.mxu0 0.0
    %1295 = vmatprep.subr.mxu0 0.0
    %1296 = vmatpush1.msra.mxu0 0.0
    %1297 = vmatprep.subr.mxu0 0.0
    %1298 = vmatpush1.msra.mxu0 0.0
    %1299 = vmatprep.subr.mxu0 0.0
    %1300 = vmatpush1.msra.mxu0 0.0
    %1301 = vmatprep.subr.mxu0 0.0
    %1302 = vmatpush1.msra.mxu0 0.0
    %1303 = vmatprep.subr.mxu0 0.0
    %1304 = vmatpush1.msra.mxu0 0.0
    %1305 = vmatprep.subr.mxu0 0.0
    %1306 = vmatpush1.msra.mxu0 0.0
    %1307 = vmatprep.subr.mxu0 0.0
    %1308 = vmatpush1.msra.mxu0 0.0
    %1309 = vmatprep.subr.mxu0 0.0
    %1310 = vmatpush1.msra.mxu0 0.0
    %1311 = vmatprep.subr.mxu0 0.0
    %1312 = vmatpush1.msra.mxu0 0.0
    %1313 = vmatprep.subr.mxu0 0.0
    %1314 = vmatpush1.msra.mxu0 0.0
    %1315 = vmatprep.subr.mxu0 0.0
    %1316 = vmatpush1.msra.mxu0 0.0
    %1317 = vmatprep.subr.mxu0 0.0
    %1318 = vmatpush1.msra.mxu0 0.0
    %1319 = vmatprep.subr.mxu0 0.0
    %1320 = vmatpush1.msra.mxu0 0.0
    %1321 = vmatprep.subr.mxu0 0.0
    %1322 = vmatpush1.msra.mxu0 0.0
    %1323 = vmatprep.subr.mxu0 0.0
    %1324 = vmatpush1.msra.mxu0 0.0
    %1325 = vmatprep.subr.mxu0 0.0
    %1326 = vmatpush1.msra.mxu0 0.0
    %1327 = vmatprep.subr.mxu0 0.0
    %1328 = vmatpush1.msra.mxu0 0.0
    %1329 = vmatprep.subr.mxu0 0.0
    %1330 = vmatpush1.msra.mxu0 0.0
    %1331 = vmatprep.subr.mxu0 0.0
    %1332 = vmatpush1.msra.mxu0 0.0
    %1333 = vmatprep.subr.mxu0 0.0
    %1334 = vmatpush1.msra.mxu0 0.0
    %1335 = vmatprep.subr.mxu0 0.0
    %1336 = vmatpush1.msra.mxu0 0.0
    %1337 = vmatprep.subr.mxu0 0.0
    %1338 = vmatpush1.msra.mxu0 0.0
    %1339 = vmatprep.subr.mxu0 0.0
    %1340 = vmatpush1.msra.mxu0 0.0
    %1341 = vmatprep.subr.mxu0 0.0
    %1342 = vmatpush1.msra.mxu0 0.0
    %1343 = vmatprep.subr.mxu0 0.0
    %1344 = vmatpush1.msra.mxu0 0.0
    %1345 = vmatprep.subr.mxu0 0.0
    %1346 = vmatpush1.msra.mxu0 0.0
    %1347 = vmatprep.mubr.f32.mxu0 0.0
    %1348 = vmatmul.mubr.f32.gmra.mrb[0].mxu0 %v244
    %v1349 = vpop.f32.mrb[0].mxu0
    %v1350 = vadd.f32 0.0, %v1349
    %v1351 = vpop.f32.mrb[0].mxu0
    %1352 = vdwg.mxu0
    %v1353 = vadd.f32 %v1275, %v1350
    %v1354 = vxor.u32 %v1353, 2147483648
    %v1355 = vmul.f32 %v1354, 1.442695
    %v1356 = vpow.pop %v1355
    %v1357 = vadd.f32 %v1356, 1.0
    %v1358 = vrcp.pop %v1357
    %v1359 = vmul.f32 1.0, %v1358
    %v1360 = vmul.f32 %v1359, 2.0
    %v1361 = vsub.f32 %v1360, 1.0
    %v1362 = vmul.f32 %v1359, 0.0
    %1364 = vrot.lane.b32.xlu0 %v1361, 64
    %v1365 = vpop.permute.xlu0 %1364
    %v1367 = vmul.f32 %v1359, %v1365
    %1369 = vrot.lane.b32.xlu0 %v1367, 32
    %v1370 = vpop.permute.xlu0 %1369
    %v1372 = vadd.f32 %v1362, %v1370
    %v1373 = vtanh.pop %v1372
    %1375 = vrot.lane.b32.xlu0 %v1373, 64
    %v1376 = vpop.permute.xlu0 %1375
    %v1378 = vmul.f32 %v1359, %v1376
    %1380 = vrot.lane.b32.xlu0 %v1378, 32
    %v1381 = vpop.permute.xlu0 %1380
    %1383 = vst.msk [vmem:[#allocation12] sm:$0x3] %vm346, %v1381
    %v1384 = vsel %vm242, %v1381, 0
    %1386 = vmatprep.subr.mxu0 0.0
    %1387 = vmatpush1.msra.mxu0 %v1151
    %1388 = vmatprep.subr.mxu0 0.0
    %1389 = vmatpush1.msra.mxu0 %v1152
    %1390 = vmatprep.subr.mxu0 0.0
    %1391 = vmatpush1.msra.mxu0 %v1153
    %1392 = vmatprep.subr.mxu0 0.0
    %1393 = vmatpush1.msra.mxu0 %v1154
    %1394 = vmatprep.subr.mxu0 0.0
    %1395 = vmatpush1.msra.mxu0 0.0
    %1396 = vmatprep.subr.mxu0 0.0
    %1397 = vmatpush1.msra.mxu0 0.0
    %1398 = vmatprep.subr.mxu0 0.0
    %1399 = vmatpush1.msra.mxu0 0.0
    %1400 = vmatprep.subr.mxu0 0.0
    %1401 = vmatpush1.msra.mxu0 0.0
    %1402 = vmatprep.subr.mxu0 0.0
    %1403 = vmatpush1.msra.mxu0 0.0
    %1404 = vmatprep.subr.mxu0 0.0
    %1405 = vmatpush1.msra.mxu0 0.0
    %1406 = vmatprep.subr.mxu0 0.0
    %1407 = vmatpush1.msra.mxu0 0.0
    %1408 = vmatprep.subr.mxu0 0.0
    %1409 = vmatpush1.msra.mxu0 0.0
    %1410 = vmatprep.subr.mxu0 0.0
    %1411 = vmatpush1.msra.mxu0 0.0
    %1412 = vmatprep.subr.mxu0 0.0
    %1413 = vmatpush1.msra.mxu0 0.0
    %1414 = vmatprep.subr.mxu0 0.0
    %1415 = vmatpush1.msra.mxu0 0.0
    %1416 = vmatprep.subr.mxu0 0.0
    %1417 = vmatpush1.msra.mxu0 0.0
    %1418 = vmatprep.subr.mxu0 0.0
    %1419 = vmatpush1.msra.mxu0 0.0
    %1420 = vmatprep.subr.mxu0 0.0
    %1421 = vmatpush1.msra.mxu0 0.0
    %1422 = vmatprep.subr.mxu0 0.0
    %1423 = vmatpush1.msra.mxu0 0.0
    %1424 = vmatprep.subr.mxu0 0.0
    %1425 = vmatpush1.msra.mxu0 0.0
    %1426 = vmatprep.subr.mxu0 0.0
    %1427 = vmatpush1.msra.mxu0 0.0
    %1428 = vmatprep.subr.mxu0 0.0
    %1429 = vmatpush1.msra.mxu0 0.0
    %1430 = vmatprep.subr.mxu0 0.0
    %1431 = vmatpush1.msra.mxu0 0.0
    %1432 = vmatprep.subr.mxu0 0.0
    %1433 = vmatpush1.msra.mxu0 0.0
    %1434 = vmatprep.subr.mxu0 0.0
    %1435 = vmatpush1.msra.mxu0 0.0
    %1436 = vmatprep.subr.mxu0 0.0
    %1437 = vmatpush1.msra.mxu0 0.0
    %1438 = vmatprep.subr.mxu0 0.0
    %1439 = vmatpush1.msra.mxu0 0.0
    %1440 = vmatprep.subr.mxu0 0.0
    %1441 = vmatpush1.msra.mxu0 0.0
    %1442 = vmatprep.subr.mxu0 0.0
    %1443 = vmatpush1.msra.mxu0 0.0
    %1444 = vmatprep.subr.mxu0 0.0
    %1445 = vmatpush1.msra.mxu0 0.0
    %1446 = vmatprep.subr.mxu0 0.0
    %1447 = vmatpush1.msra.mxu0 0.0
    %1448 = vmatprep.subr.mxu0 0.0
    %1449 = vmatpush1.msra.mxu0 0.0
    %1450 = vmatprep.mubr.f32.mxu0 0.0
    %1451 = vmatmul.mubr.f32.gmra.mrb[0].mxu0 %v1384
    %v1452 = vpop.f32.mrb[0].mxu0
    %v1453 = vadd.f32 0.0, %v1452
    %v1454 = vpop.f32.mrb[0].mxu0
    %1455 = vdwg.mxu0
    %v1457 = vrot.slane %v1453, 6
    %v1459 = vadd.f32 %v1275, %v1457
    %v1460 = vxor.u32 %v1459, 2147483648
    %v1461 = vmul.f32 %v1460, 1.442695
    %v1462 = vpow.pop %v1461
    %v1463 = vadd.f32 %v1462, 1.0
    %v1464 = vrcp.pop %v1463
    %v1465 = vmul.f32 1.0, %v1464
    %v1466 = vmul.f32 %v1465, 2.0
    %v1467 = vsub.f32 %v1466, 1.0
    %v1469 = vrot.slane %v1372, 6
    %v1471 = vmul.f32 %v1465, %v1469
    %1473 = vrot.lane.b32.xlu0 %v1467, 64
    %v1474 = vpop.permute.xlu0 %1473
    %v1476 = vmul.f32 %v1465, %v1474
    %1478 = vrot.lane.b32.xlu0 %v1476, 32
    %v1479 = vpop.permute.xlu0 %1478
    %v1481 = vadd.f32 %v1471, %v1479
    %v1482 = vtanh.pop %v1481
    %1484 = vrot.lane.b32.xlu0 %v1482, 64
    %v1485 = vpop.permute.xlu0 %1484
    %v1487 = vmul.f32 %v1465, %v1485
    %1489 = vrot.lane.b32.xlu0 %v1487, 32
    %v1490 = vpop.permute.xlu0 %1489
    %s1492 = scalar_lea.vmem [#allocation12], 2
    %1493 = vst.msk [vmem:[%s1492 - $0x2] sm:$0xc] %vm457, %v1490
    %v1494 = vrot.slane %v1487, 2
    %1495 = vrot.lane.b32.xlu0 %v1494, 32
    %v1496 = vpop.permute.xlu0 %1495
    %v1497 = vsel %vm242, %v1496, 0
    %1499 = vmatprep.subr.mxu0 0.0
    %1500 = vmatpush1.msra.mxu0 %v1151
    %1501 = vmatprep.subr.mxu0 0.0
    %1502 = vmatpush1.msra.mxu0 %v1152
    %1503 = vmatprep.subr.mxu0 0.0
    %1504 = vmatpush1.msra.mxu0 %v1153
    %1505 = vmatprep.subr.mxu0 0.0
    %1506 = vmatpush1.msra.mxu0 %v1154
    %1507 = vmatprep.subr.mxu0 0.0
    %1508 = vmatpush1.msra.mxu0 0.0
    %1509 = vmatprep.subr.mxu0 0.0
    %1510 = vmatpush1.msra.mxu0 0.0
    %1511 = vmatprep.subr.mxu0 0.0
    %1512 = vmatpush1.msra.mxu0 0.0
    %1513 = vmatprep.subr.mxu0 0.0
    %1514 = vmatpush1.msra.mxu0 0.0
    %1515 = vmatprep.subr.mxu0 0.0
    %1516 = vmatpush1.msra.mxu0 0.0
    %1517 = vmatprep.subr.mxu0 0.0
    %1518 = vmatpush1.msra.mxu0 0.0
    %1519 = vmatprep.subr.mxu0 0.0
    %1520 = vmatpush1.msra.mxu0 0.0
    %1521 = vmatprep.subr.mxu0 0.0
    %1522 = vmatpush1.msra.mxu0 0.0
    %1523 = vmatprep.subr.mxu0 0.0
    %1524 = vmatpush1.msra.mxu0 0.0
    %1525 = vmatprep.subr.mxu0 0.0
    %1526 = vmatpush1.msra.mxu0 0.0
    %1527 = vmatprep.subr.mxu0 0.0
    %1528 = vmatpush1.msra.mxu0 0.0
    %1529 = vmatprep.subr.mxu0 0.0
    %1530 = vmatpush1.msra.mxu0 0.0
    %1531 = vmatprep.subr.mxu0 0.0
    %1532 = vmatpush1.msra.mxu0 0.0
    %1533 = vmatprep.subr.mxu0 0.0
    %1534 = vmatpush1.msra.mxu0 0.0
    %1535 = vmatprep.subr.mxu0 0.0
    %1536 = vmatpush1.msra.mxu0 0.0
    %1537 = vmatprep.subr.mxu0 0.0
    %1538 = vmatpush1.msra.mxu0 0.0
    %1539 = vmatprep.subr.mxu0 0.0
    %1540 = vmatpush1.msra.mxu0 0.0
    %1541 = vmatprep.subr.mxu0 0.0
    %1542 = vmatpush1.msra.mxu0 0.0
    %1543 = vmatprep.subr.mxu0 0.0
    %1544 = vmatpush1.msra.mxu0 0.0
    %1545 = vmatprep.subr.mxu0 0.0
    %1546 = vmatpush1.msra.mxu0 0.0
    %1547 = vmatprep.subr.mxu0 0.0
    %1548 = vmatpush1.msra.mxu0 0.0
    %1549 = vmatprep.subr.mxu0 0.0
    %1550 = vmatpush1.msra.mxu0 0.0
    %1551 = vmatprep.subr.mxu0 0.0
    %1552 = vmatpush1.msra.mxu0 0.0
    %1553 = vmatprep.subr.mxu0 0.0
    %1554 = vmatpush1.msra.mxu0 0.0
    %1555 = vmatprep.subr.mxu0 0.0
    %1556 = vmatpush1.msra.mxu0 0.0
    %1557 = vmatprep.subr.mxu0 0.0
    %1558 = vmatpush1.msra.mxu0 0.0
    %1559 = vmatprep.subr.mxu0 0.0
    %1560 = vmatpush1.msra.mxu0 0.0
    %1561 = vmatprep.subr.mxu0 0.0
    %1562 = vmatpush1.msra.mxu0 0.0
    %1563 = vmatprep.mubr.f32.mxu0 0.0
    %1564 = vmatmul.mubr.f32.gmra.mrb[0].mxu0 %v1497
    %v1565 = vpop.f32.mrb[0].mxu0
    %v1566 = vadd.f32 0.0, %v1565
    %v1567 = vpop.f32.mrb[0].mxu0
    %1568 = vdwg.mxu0
    %v1570 = vrot.slane %v1566, 4
    %v1572 = vadd.f32 %v1275, %v1570
    %v1573 = vxor.u32 %v1572, 2147483648
    %v1574 = vmul.f32 %v1573, 1.442695
    %v1575 = vpow.pop %v1574
    %v1576 = vadd.f32 %v1575, 1.0
    %v1577 = vrcp.pop %v1576
    %v1578 = vmul.f32 1.0, %v1577
    %v1579 = vmul.f32 %v1578, 2.0
    %v1580 = vsub.f32 %v1579, 1.0
    %v1582 = vrot.slane %v1481, 6
    %v1584 = vmul.f32 %v1578, %v1582
    %1586 = vrot.lane.b32.xlu0 %v1580, 64
    %v1587 = vpop.permute.xlu0 %1586
    %v1589 = vmul.f32 %v1578, %v1587
    %1591 = vrot.lane.b32.xlu0 %v1589, 32
    %v1592 = vpop.permute.xlu0 %1591
    %v1594 = vadd.f32 %v1584, %v1592
    %v1595 = vtanh.pop %v1594
    %1597 = vrot.lane.b32.xlu0 %v1595, 64
    %v1598 = vpop.permute.xlu0 %1597
    %v1600 = vmul.f32 %v1578, %v1598
    %1602 = vrot.lane.b32.xlu0 %v1600, 32
    %v1603 = vpop.permute.xlu0 %1602
    %s1605 = scalar_lea.vmem [#allocation12], 4
    %1606 = vst.msk [vmem:[%s1605 - $0x4] sm:$0x30] %vm571, %v1603
    %v1607 = vrot.slane %v1600, 4
    %1608 = vrot.lane.b32.xlu0 %v1607, 32
    %v1609 = vpop.permute.xlu0 %1608
    %v1610 = vsel %vm242, %v1609, 0
    %1612 = vmatprep.subr.mxu0 0.0
    %1613 = vmatpush1.msra.mxu0 %v1151
    %1614 = vmatprep.subr.mxu0 0.0
    %1615 = vmatpush1.msra.mxu0 %v1152
    %1616 = vmatprep.subr.mxu0 0.0
    %1617 = vmatpush1.msra.mxu0 %v1153
    %1618 = vmatprep.subr.mxu0 0.0
    %1619 = vmatpush1.msra.mxu0 %v1154
    %1620 = vmatprep.subr.mxu0 0.0
    %1621 = vmatpush1.msra.mxu0 0.0
    %1622 = vmatprep.subr.mxu0 0.0
    %1623 = vmatpush1.msra.mxu0 0.0
    %1624 = vmatprep.subr.mxu0 0.0
    %1625 = vmatpush1.msra.mxu0 0.0
    %1626 = vmatprep.subr.mxu0 0.0
    %1627 = vmatpush1.msra.mxu0 0.0
    %1628 = vmatprep.subr.mxu0 0.0
    %1629 = vmatpush1.msra.mxu0 0.0
    %1630 = vmatprep.subr.mxu0 0.0
    %1631 = vmatpush1.msra.mxu0 0.0
    %1632 = vmatprep.subr.mxu0 0.0
    %1633 = vmatpush1.msra.mxu0 0.0
    %1634 = vmatprep.subr.mxu0 0.0
    %1635 = vmatpush1.msra.mxu0 0.0
    %1636 = vmatprep.subr.mxu0 0.0
    %1637 = vmatpush1.msra.mxu0 0.0
    %1638 = vmatprep.subr.mxu0 0.0
    %1639 = vmatpush1.msra.mxu0 0.0
    %1640 = vmatprep.subr.mxu0 0.0
    %1641 = vmatpush1.msra.mxu0 0.0
    %1642 = vmatprep.subr.mxu0 0.0
    %1643 = vmatpush1.msra.mxu0 0.0
    %1644 = vmatprep.subr.mxu0 0.0
    %1645 = vmatpush1.msra.mxu0 0.0
    %1646 = vmatprep.subr.mxu0 0.0
    %1647 = vmatpush1.msra.mxu0 0.0
    %1648 = vmatprep.subr.mxu0 0.0
    %1649 = vmatpush1.msra.mxu0 0.0
    %1650 = vmatprep.subr.mxu0 0.0
    %1651 = vmatpush1.msra.mxu0 0.0
    %1652 = vmatprep.subr.mxu0 0.0
    %1653 = vmatpush1.msra.mxu0 0.0
    %1654 = vmatprep.subr.mxu0 0.0
    %1655 = vmatpush1.msra.mxu0 0.0
    %1656 = vmatprep.subr.mxu0 0.0
    %1657 = vmatpush1.msra.mxu0 0.0
    %1658 = vmatprep.subr.mxu0 0.0
    %1659 = vmatpush1.msra.mxu0 0.0
    %1660 = vmatprep.subr.mxu0 0.0
    %1661 = vmatpush1.msra.mxu0 0.0
    %1662 = vmatprep.subr.mxu0 0.0
    %1663 = vmatpush1.msra.mxu0 0.0
    %1664 = vmatprep.subr.mxu0 0.0
    %1665 = vmatpush1.msra.mxu0 0.0
    %1666 = vmatprep.subr.mxu0 0.0
    %1667 = vmatpush1.msra.mxu0 0.0
    %1668 = vmatprep.subr.mxu0 0.0
    %1669 = vmatpush1.msra.mxu0 0.0
    %1670 = vmatprep.subr.mxu0 0.0
    %1671 = vmatpush1.msra.mxu0 0.0
    %1672 = vmatprep.subr.mxu0 0.0
    %1673 = vmatpush1.msra.mxu0 0.0
    %1674 = vmatprep.subr.mxu0 0.0
    %1675 = vmatpush1.msra.mxu0 0.0
    %1676 = vmatprep.mubr.f32.mxu0 0.0
    %1677 = vmatmul.mubr.f32.gmra.mrb[0].mxu0 %v1610
    %v1678 = vpop.f32.mrb[0].mxu0
    %v1679 = vadd.f32 0.0, %v1678
    %v1680 = vpop.f32.mrb[0].mxu0
    %1681 = vdwg.mxu0
    %v1683 = vrot.slane %v1679, 2
    %v1685 = vadd.f32 %v1275, %v1683
    %v1686 = vxor.u32 %v1685, 2147483648
    %v1687 = vmul.f32 %v1686, 1.442695
    %v1688 = vpow.pop %v1687
    %v1689 = vadd.f32 %v1688, 1.0
    %v1690 = vrcp.pop %v1689
    %v1691 = vmul.f32 1.0, %v1690
    %v1692 = vmul.f32 %v1691, 2.0
    %v1693 = vsub.f32 %v1692, 1.0
    %v1695 = vrot.slane %v1594, 6
    %v1697 = vmul.f32 %v1691, %v1695
    %1699 = vrot.lane.b32.xlu0 %v1693, 64
    %v1700 = vpop.permute.xlu0 %1699
    %v1702 = vmul.f32 %v1691, %v1700
    %1704 = vrot.lane.b32.xlu0 %v1702, 32
    %v1705 = vpop.permute.xlu0 %1704
    %v1707 = vadd.f32 %v1697, %v1705
    %v1708 = vtanh.pop %v1707
    %1710 = vrot.lane.b32.xlu0 %v1708, 64
    %v1711 = vpop.permute.xlu0 %1710
    %v1713 = vmul.f32 %v1691, %v1711
    %1715 = vrot.lane.b32.xlu0 %v1713, 32
    %v1716 = vpop.permute.xlu0 %1715
    %s1718 = scalar_lea.vmem [#allocation12], 6
    %1719 = vst.msk [vmem:[%s1718 - $0x6] sm:$0xc0] %vm685, %v1716
    %v1720 = vrot.slane %v1713, 6
    %1721 = vrot.lane.b32.xlu0 %v1720, 32
    %v1722 = vpop.permute.xlu0 %1721
    %v1723 = vsel %vm242, %v1722, 0
    %1725 = vmatprep.subr.mxu0 0.0
    %1726 = vmatpush1.msra.mxu0 %v1151
    %1727 = vmatprep.subr.mxu0 0.0
    %1728 = vmatpush1.msra.mxu0 %v1152
    %1729 = vmatprep.subr.mxu0 0.0
    %1730 = vmatpush1.msra.mxu0 %v1153
    %1731 = vmatprep.subr.mxu0 0.0
    %1732 = vmatpush1.msra.mxu0 %v1154
    %1733 = vmatprep.subr.mxu0 0.0
    %1734 = vmatpush1.msra.mxu0 0.0
    %1735 = vmatprep.subr.mxu0 0.0
    %1736 = vmatpush1.msra.mxu0 0.0
    %1737 = vmatprep.subr.mxu0 0.0
    %1738 = vmatpush1.msra.mxu0 0.0
    %1739 = vmatprep.subr.mxu0 0.0
    %1740 = vmatpush1.msra.mxu0 0.0
    %1741 = vmatprep.subr.mxu0 0.0
    %1742 = vmatpush1.msra.mxu0 0.0
    %1743 = vmatprep.subr.mxu0 0.0
    %1744 = vmatpush1.msra.mxu0 0.0
    %1745 = vmatprep.subr.mxu0 0.0
    %1746 = vmatpush1.msra.mxu0 0.0
    %1747 = vmatprep.subr.mxu0 0.0
    %1748 = vmatpush1.msra.mxu0 0.0
    %1749 = vmatprep.subr.mxu0 0.0
    %1750 = vmatpush1.msra.mxu0 0.0
    %1751 = vmatprep.subr.mxu0 0.0
    %1752 = vmatpush1.msra.mxu0 0.0
    %1753 = vmatprep.subr.mxu0 0.0
    %1754 = vmatpush1.msra.mxu0 0.0
    %1755 = vmatprep.subr.mxu0 0.0
    %1756 = vmatpush1.msra.mxu0 0.0
    %1757 = vmatprep.subr.mxu0 0.0
    %1758 = vmatpush1.msra.mxu0 0.0
    %1759 = vmatprep.subr.mxu0 0.0
    %1760 = vmatpush1.msra.mxu0 0.0
    %1761 = vmatprep.subr.mxu0 0.0
    %1762 = vmatpush1.msra.mxu0 0.0
    %1763 = vmatprep.subr.mxu0 0.0
    %1764 = vmatpush1.msra.mxu0 0.0
    %1765 = vmatprep.subr.mxu0 0.0
    %1766 = vmatpush1.msra.mxu0 0.0
    %1767 = vmatprep.subr.mxu0 0.0
    %1768 = vmatpush1.msra.mxu0 0.0
    %1769 = vmatprep.subr.mxu0 0.0
    %1770 = vmatpush1.msra.mxu0 0.0
    %1771 = vmatprep.subr.mxu0 0.0
    %1772 = vmatpush1.msra.mxu0 0.0
    %1773 = vmatprep.subr.mxu0 0.0
    %1774 = vmatpush1.msra.mxu0 0.0
    %1775 = vmatprep.subr.mxu0 0.0
    %1776 = vmatpush1.msra.mxu0 0.0
    %1777 = vmatprep.subr.mxu0 0.0
    %1778 = vmatpush1.msra.mxu0 0.0
    %1779 = vmatprep.subr.mxu0 0.0
    %1780 = vmatpush1.msra.mxu0 0.0
    %1781 = vmatprep.subr.mxu0 0.0
    %1782 = vmatpush1.msra.mxu0 0.0
    %1783 = vmatprep.subr.mxu0 0.0
    %1784 = vmatpush1.msra.mxu0 0.0
    %1785 = vmatprep.subr.mxu0 0.0
    %1786 = vmatpush1.msra.mxu0 0.0
    %1787 = vmatprep.subr.mxu0 0.0
    %1788 = vmatpush1.msra.mxu0 0.0
    %1789 = vmatprep.mubr.f32.mxu0 0.0
    %1790 = vmatmul.mubr.f32.gmra.mrb[0].mxu0 %v1723
    %v1791 = vpop.f32.mrb[0].mxu0
    %v1792 = vadd.f32 0.0, %v1791
    %v1793 = vpop.f32.mrb[0].mxu0
    %1794 = vdwg.mxu0
    %v1795 = vadd.f32 %v1280, %v1792
    %v1796 = vxor.u32 %v1795, 2147483648
    %v1797 = vmul.f32 %v1796, 1.442695
    %v1798 = vpow.pop %v1797
    %v1799 = vadd.f32 %v1798, 1.0
    %v1800 = vrcp.pop %v1799
    %v1801 = vmul.f32 1.0, %v1800
    %v1802 = vmul.f32 %v1801, 2.0
    %v1803 = vsub.f32 %v1802, 1.0
    %v1805 = vrot.slane %v1707, 6
    %v1807 = vmul.f32 %v1801, %v1805
    %1809 = vrot.lane.b32.xlu0 %v1803, 64
    %v1810 = vpop.permute.xlu0 %1809
    %v1812 = vmul.f32 %v1801, %v1810
    %1814 = vrot.lane.b32.xlu0 %v1812, 32
    %v1815 = vpop.permute.xlu0 %1814
    %v1817 = vadd.f32 %v1807, %v1815
    %v1818 = vtanh.pop %v1817
    %1820 = vrot.lane.b32.xlu0 %v1818, 64
    %v1821 = vpop.permute.xlu0 %1820
    %v1823 = vmul.f32 %v1801, %v1821
    %1825 = vrot.lane.b32.xlu0 %v1823, 32
    %v1826 = vpop.permute.xlu0 %1825
    %s1828 = scalar_lea.vmem [#allocation12], 8
    %1829 = vst.msk [vmem:[%s1828] sm:$0x3] %vm346, %v1826
    %v1830 = vsel %vm242, %v1826, 0
    %1832 = vmatprep.subr.mxu0 0.0
    %1833 = vmatpush1.msra.mxu0 %v1151
    %1834 = vmatprep.subr.mxu0 0.0
    %1835 = vmatpush1.msra.mxu0 %v1152
    %1836 = vmatprep.subr.mxu0 0.0
    %1837 = vmatpush1.msra.mxu0 %v1153
    %1838 = vmatprep.subr.mxu0 0.0
    %1839 = vmatpush1.msra.mxu0 %v1154
    %1840 = vmatprep.subr.mxu0 0.0
    %1841 = vmatpush1.msra.mxu0 0.0
    %1842 = vmatprep.subr.mxu0 0.0
    %1843 = vmatpush1.msra.mxu0 0.0
    %1844 = vmatprep.subr.mxu0 0.0
    %1845 = vmatpush1.msra.mxu0 0.0
    %1846 = vmatprep.subr.mxu0 0.0
    %1847 = vmatpush1.msra.mxu0 0.0
    %1848 = vmatprep.subr.mxu0 0.0
    %1849 = vmatpush1.msra.mxu0 0.0
    %1850 = vmatprep.subr.mxu0 0.0
    %1851 = vmatpush1.msra.mxu0 0.0
    %1852 = vmatprep.subr.mxu0 0.0
    %1853 = vmatpush1.msra.mxu0 0.0
    %1854 = vmatprep.subr.mxu0 0.0
    %1855 = vmatpush1.msra.mxu0 0.0
    %1856 = vmatprep.subr.mxu0 0.0
    %1857 = vmatpush1.msra.mxu0 0.0
    %1858 = vmatprep.subr.mxu0 0.0
    %1859 = vmatpush1.msra.mxu0 0.0
    %1860 = vmatprep.subr.mxu0 0.0
    %1861 = vmatpush1.msra.mxu0 0.0
    %1862 = vmatprep.subr.mxu0 0.0
    %1863 = vmatpush1.msra.mxu0 0.0
    %1864 = vmatprep.subr.mxu0 0.0
    %1865 = vmatpush1.msra.mxu0 0.0
    %1866 = vmatprep.subr.mxu0 0.0
    %1867 = vmatpush1.msra.mxu0 0.0
    %1868 = vmatprep.subr.mxu0 0.0
    %1869 = vmatpush1.msra.mxu0 0.0
    %1870 = vmatprep.subr.mxu0 0.0
    %1871 = vmatpush1.msra.mxu0 0.0
    %1872 = vmatprep.subr.mxu0 0.0
    %1873 = vmatpush1.msra.mxu0 0.0
    %1874 = vmatprep.subr.mxu0 0.0
    %1875 = vmatpush1.msra.mxu0 0.0
    %1876 = vmatprep.subr.mxu0 0.0
    %1877 = vmatpush1.msra.mxu0 0.0
    %1878 = vmatprep.subr.mxu0 0.0
    %1879 = vmatpush1.msra.mxu0 0.0
    %1880 = vmatprep.subr.mxu0 0.0
    %1881 = vmatpush1.msra.mxu0 0.0
    %1882 = vmatprep.subr.mxu0 0.0
    %1883 = vmatpush1.msra.mxu0 0.0
    %1884 = vmatprep.subr.mxu0 0.0
    %1885 = vmatpush1.msra.mxu0 0.0
    %1886 = vmatprep.subr.mxu0 0.0
    %1887 = vmatpush1.msra.mxu0 0.0
    %1888 = vmatprep.subr.mxu0 0.0
    %1889 = vmatpush1.msra.mxu0 0.0
    %1890 = vmatprep.subr.mxu0 0.0
    %1891 = vmatpush1.msra.mxu0 0.0
    %1892 = vmatprep.subr.mxu0 0.0
    %1893 = vmatpush1.msra.mxu0 0.0
    %1894 = vmatprep.subr.mxu0 0.0
    %1895 = vmatpush1.msra.mxu0 0.0
    %1896 = vmatprep.mubr.f32.mxu0 0.0
    %1897 = vmatmul.mubr.f32.gmra.mrb[0].mxu0 %v1830
    %v1898 = vpop.f32.mrb[0].mxu0
    %v1899 = vadd.f32 0.0, %v1898
    %v1900 = vpop.f32.mrb[0].mxu0
    %1901 = vdwg.mxu0
    %v1903 = vrot.slane %v1899, 6
    %v1905 = vadd.f32 %v1280, %v1903
    %v1906 = vxor.u32 %v1905, 2147483648
    %v1907 = vmul.f32 %v1906, 1.442695
    %v1908 = vpow.pop %v1907
    %v1909 = vadd.f32 %v1908, 1.0
    %v1910 = vrcp.pop %v1909
    %v1911 = vmul.f32 1.0, %v1910
    %v1912 = vmul.f32 %v1911, 2.0
    %v1913 = vsub.f32 %v1912, 1.0
    %v1915 = vrot.slane %v1817, 6
    %v1917 = vmul.f32 %v1911, %v1915
    %1919 = vrot.lane.b32.xlu0 %v1913, 64
    %v1920 = vpop.permute.xlu0 %1919
    %v1922 = vmul.f32 %v1911, %v1920
    %1924 = vrot.lane.b32.xlu0 %v1922, 32
    %v1925 = vpop.permute.xlu0 %1924
    %v1927 = vadd.f32 %v1917, %v1925
    %v1928 = vtanh.pop %v1927
    %1930 = vrot.lane.b32.xlu0 %v1928, 64
    %v1931 = vpop.permute.xlu0 %1930
    %v1933 = vmul.f32 %v1911, %v1931
    %1935 = vrot.lane.b32.xlu0 %v1933, 32
    %v1936 = vpop.permute.xlu0 %1935
    %s1938 = scalar_lea.vmem [#allocation12], 10
    %1939 = vst.msk [vmem:[%s1938 - $0x2] sm:$0xc] %vm457, %v1936
    %v1940 = vrot.slane %v1933, 2
    %1941 = vrot.lane.b32.xlu0 %v1940, 32
    %v1942 = vpop.permute.xlu0 %1941
    %v1943 = vsel %vm242, %v1942, 0
    %1945 = vmatprep.subr.mxu0 0.0
    %1946 = vmatpush1.msra.mxu0 %v1151
    %1947 = vmatprep.subr.mxu0 0.0
    %1948 = vmatpush1.msra.mxu0 %v1152
    %1949 = vmatprep.subr.mxu0 0.0
    %1950 = vmatpush1.msra.mxu0 %v1153
    %1951 = vmatprep.subr.mxu0 0.0
    %1952 = vmatpush1.msra.mxu0 %v1154
    %1953 = vmatprep.subr.mxu0 0.0
    %1954 = vmatpush1.msra.mxu0 0.0
    %1955 = vmatprep.subr.mxu0 0.0
    %1956 = vmatpush1.msra.mxu0 0.0
    %1957 = vmatprep.subr.mxu0 0.0
    %1958 = vmatpush1.msra.mxu0 0.0
    %1959 = vmatprep.subr.mxu0 0.0
    %1960 = vmatpush1.msra.mxu0 0.0
    %1961 = vmatprep.subr.mxu0 0.0
    %1962 = vmatpush1.msra.mxu0 0.0
    %1963 = vmatprep.subr.mxu0 0.0
    %1964 = vmatpush1.msra.mxu0 0.0
    %1965 = vmatprep.subr.mxu0 0.0
    %1966 = vmatpush1.msra.mxu0 0.0
    %1967 = vmatprep.subr.mxu0 0.0
    %1968 = vmatpush1.msra.mxu0 0.0
    %1969 = vmatprep.subr.mxu0 0.0
    %1970 = vmatpush1.msra.mxu0 0.0
    %1971 = vmatprep.subr.mxu0 0.0
    %1972 = vmatpush1.msra.mxu0 0.0
    %1973 = vmatprep.subr.mxu0 0.0
    %1974 = vmatpush1.msra.mxu0 0.0
    %1975 = vmatprep.subr.mxu0 0.0
    %1976 = vmatpush1.msra.mxu0 0.0
    %1977 = vmatprep.subr.mxu0 0.0
    %1978 = vmatpush1.msra.mxu0 0.0
    %1979 = vmatprep.subr.mxu0 0.0
    %1980 = vmatpush1.msra.mxu0 0.0
    %1981 = vmatprep.subr.mxu0 0.0
    %1982 = vmatpush1.msra.mxu0 0.0
    %1983 = vmatprep.subr.mxu0 0.0
    %1984 = vmatpush1.msra.mxu0 0.0
    %1985 = vmatprep.subr.mxu0 0.0
    %1986 = vmatpush1.msra.mxu0 0.0
    %1987 = vmatprep.subr.mxu0 0.0
    %1988 = vmatpush1.msra.mxu0 0.0
    %1989 = vmatprep.subr.mxu0 0.0
    %1990 = vmatpush1.msra.mxu0 0.0
    %1991 = vmatprep.subr.mxu0 0.0
    %1992 = vmatpush1.msra.mxu0 0.0
    %1993 = vmatprep.subr.mxu0 0.0
    %1994 = vmatpush1.msra.mxu0 0.0
    %1995 = vmatprep.subr.mxu0 0.0
    %1996 = vmatpush1.msra.mxu0 0.0
    %1997 = vmatprep.subr.mxu0 0.0
    %1998 = vmatpush1.msra.mxu0 0.0
    %1999 = vmatprep.subr.mxu0 0.0
    %2000 = vmatpush1.msra.mxu0 0.0
    %2001 = vmatprep.subr.mxu0 0.0
    %2002 = vmatpush1.msra.mxu0 0.0
    %2003 = vmatprep.subr.mxu0 0.0
    %2004 = vmatpush1.msra.mxu0 0.0
    %2005 = vmatprep.subr.mxu0 0.0
    %2006 = vmatpush1.msra.mxu0 0.0
    %2007 = vmatprep.subr.mxu0 0.0
    %2008 = vmatpush1.msra.mxu0 0.0
    %2009 = vmatprep.mubr.f32.mxu0 0.0
    %2010 = vmatmul.mubr.f32.gmra.mrb[0].mxu0 %v1943
    %v2011 = vpop.f32.mrb[0].mxu0
    %v2012 = vadd.f32 0.0, %v2011
    %v2013 = vpop.f32.mrb[0].mxu0
    %2014 = vdwg.mxu0
    %v2016 = vrot.slane %v2012, 4
    %v2018 = vadd.f32 %v1280, %v2016
    %v2019 = vxor.u32 %v2018, 2147483648
    %v2020 = vmul.f32 %v2019, 1.442695
    %v2021 = vpow.pop %v2020
    %v2022 = vadd.f32 %v2021, 1.0
    %v2023 = vrcp.pop %v2022
    %v2024 = vmul.f32 1.0, %v2023
    %v2025 = vmul.f32 %v2024, 2.0
    %v2026 = vsub.f32 %v2025, 1.0
    %v2028 = vrot.slane %v1927, 6
    %v2030 = vmul.f32 %v2024, %v2028
    %2032 = vrot.lane.b32.xlu0 %v2026, 64
    %v2033 = vpop.permute.xlu0 %2032
    %v2035 = vmul.f32 %v2024, %v2033
    %2037 = vrot.lane.b32.xlu0 %v2035, 32
    %v2038 = vpop.permute.xlu0 %2037
    %v2040 = vadd.f32 %v2030, %v2038
    %v2041 = vtanh.pop %v2040
    %2043 = vrot.lane.b32.xlu0 %v2041, 64
    %v2044 = vpop.permute.xlu0 %2043
    %v2046 = vmul.f32 %v2024, %v2044
    %2048 = vrot.lane.b32.xlu0 %v2046, 32
    %v2049 = vpop.permute.xlu0 %2048
    %s2051 = scalar_lea.vmem [#allocation12], 12
    %2052 = vst.msk [vmem:[%s2051 - $0x4] sm:$0x30] %vm571, %v2049
    %v2053 = vrot.slane %v2046, 4
    %2054 = vrot.lane.b32.xlu0 %v2053, 32
    %v2055 = vpop.permute.xlu0 %2054
    %v2056 = vsel %vm242, %v2055, 0
    %2058 = vmatprep.subr.mxu0 0.0
    %2059 = vmatpush1.msra.mxu0 %v1151
    %2060 = vmatprep.subr.mxu0 0.0
    %2061 = vmatpush1.msra.mxu0 %v1152
    %2062 = vmatprep.subr.mxu0 0.0
    %2063 = vmatpush1.msra.mxu0 %v1153
    %2064 = vmatprep.subr.mxu0 0.0
    %2065 = vmatpush1.msra.mxu0 %v1154
    %2066 = vmatprep.subr.mxu0 0.0
    %2067 = vmatpush1.msra.mxu0 0.0
    %2068 = vmatprep.subr.mxu0 0.0
    %2069 = vmatpush1.msra.mxu0 0.0
    %2070 = vmatprep.subr.mxu0 0.0
    %2071 = vmatpush1.msra.mxu0 0.0
    %2072 = vmatprep.subr.mxu0 0.0
    %2073 = vmatpush1.msra.mxu0 0.0
    %2074 = vmatprep.subr.mxu0 0.0
    %2075 = vmatpush1.msra.mxu0 0.0
    %2076 = vmatprep.subr.mxu0 0.0
    %2077 = vmatpush1.msra.mxu0 0.0
    %2078 = vmatprep.subr.mxu0 0.0
    %2079 = vmatpush1.msra.mxu0 0.0
    %2080 = vmatprep.subr.mxu0 0.0
    %2081 = vmatpush1.msra.mxu0 0.0
    %2082 = vmatprep.subr.mxu0 0.0
    %2083 = vmatpush1.msra.mxu0 0.0
    %2084 = vmatprep.subr.mxu0 0.0
    %2085 = vmatpush1.msra.mxu0 0.0
    %2086 = vmatprep.subr.mxu0 0.0
    %2087 = vmatpush1.msra.mxu0 0.0
    %2088 = vmatprep.subr.mxu0 0.0
    %2089 = vmatpush1.msra.mxu0 0.0
    %2090 = vmatprep.subr.mxu0 0.0
    %2091 = vmatpush1.msra.mxu0 0.0
    %2092 = vmatprep.subr.mxu0 0.0
    %2093 = vmatpush1.msra.mxu0 0.0
    %2094 = vmatprep.subr.mxu0 0.0
    %2095 = vmatpush1.msra.mxu0 0.0
    %2096 = vmatprep.subr.mxu0 0.0
    %2097 = vmatpush1.msra.mxu0 0.0
    %2098 = vmatprep.subr.mxu0 0.0
    %2099 = vmatpush1.msra.mxu0 0.0
    %2100 = vmatprep.subr.mxu0 0.0
    %2101 = vmatpush1.msra.mxu0 0.0
    %2102 = vmatprep.subr.mxu0 0.0
    %2103 = vmatpush1.msra.mxu0 0.0
    %2104 = vmatprep.subr.mxu0 0.0
    %2105 = vmatpush1.msra.mxu0 0.0
    %2106 = vmatprep.subr.mxu0 0.0
    %2107 = vmatpush1.msra.mxu0 0.0
    %2108 = vmatprep.subr.mxu0 0.0
    %2109 = vmatpush1.msra.mxu0 0.0
    %2110 = vmatprep.subr.mxu0 0.0
    %2111 = vmatpush1.msra.mxu0 0.0
    %2112 = vmatprep.subr.mxu0 0.0
    %2113 = vmatpush1.msra.mxu0 0.0
    %2114 = vmatprep.subr.mxu0 0.0
    %2115 = vmatpush1.msra.mxu0 0.0
    %2116 = vmatprep.subr.mxu0 0.0
    %2117 = vmatpush1.msra.mxu0 0.0
    %2118 = vmatprep.subr.mxu0 0.0
    %2119 = vmatpush1.msra.mxu0 0.0
    %2120 = vmatprep.subr.mxu0 0.0
    %2121 = vmatpush1.msra.mxu0 0.0
    %2122 = vmatprep.mubr.f32.mxu0 0.0
    %2123 = vmatmul.mubr.f32.gmra.mrb[0].mxu0 %v2056
    %v2124 = vpop.f32.mrb[0].mxu0
    %v2125 = vadd.f32 0.0, %v2124
    %v2126 = vpop.f32.mrb[0].mxu0
    %2127 = vdwg.mxu0
    %v2129 = vrot.slane %v2125, 2
    %v2131 = vadd.f32 %v1280, %v2129
    %v2132 = vxor.u32 %v2131, 2147483648
    %v2133 = vmul.f32 %v2132, 1.442695
    %v2134 = vpow.pop %v2133
    %v2135 = vadd.f32 %v2134, 1.0
    %v2136 = vrcp.pop %v2135
    %v2137 = vmul.f32 1.0, %v2136
    %v2138 = vmul.f32 %v2137, 2.0
    %v2139 = vsub.f32 %v2138, 1.0
    %v2141 = vrot.slane %v2040, 6
    %v2143 = vmul.f32 %v2137, %v2141
    %2145 = vrot.lane.b32.xlu0 %v2139, 64
    %v2146 = vpop.permute.xlu0 %2145
    %v2148 = vmul.f32 %v2137, %v2146
    %2150 = vrot.lane.b32.xlu0 %v2148, 32
    %v2151 = vpop.permute.xlu0 %2150
    %v2153 = vadd.f32 %v2143, %v2151
    %v2154 = vtanh.pop %v2153
    %2156 = vrot.lane.b32.xlu0 %v2154, 64
    %v2157 = vpop.permute.xlu0 %2156
    %v2159 = vmul.f32 %v2137, %v2157
    %2161 = vrot.lane.b32.xlu0 %v2159, 32
    %v2162 = vpop.permute.xlu0 %2161
    %s2164 = scalar_lea.vmem [#allocation12], 14
    %2165 = vst.msk [vmem:[%s2164 - $0x6] sm:$0xc0] %vm685, %v2162
    %s2166 = scalar_lea.vmem [#allocation13], 2
    %2167 = vst.msk [vmem:[%s2166 - $0x6] sm:$0xc0] %vm685, %v2162
    %2169 = vrot.lane.b32.xlu0 %v2153, 96
    %v2170 = vpop.permute.xlu0 %2169
    %s2172 = scalar_lea.vmem [#allocation15], 2
    %2173 = vst.msk [vmem:[%s2172 - $0x6] sm:$0xc0] %vm685, %v2170
    // Predicated region
    $region50: #{tpu_custom_call.1} parent=1 // pred_check
      _
    $region51: #{tpu_custom_call.1} parent=1 // pred_check_branch
      %2175 = sbr.rel (0) target = $region53
    $region52: #{tpu_custom_call.1} parent=1 // pred_region
      %s2177 = ssub.s32 256, 256
      %2178 = vsyncadd [#allocation5], %s2177
      %s2179 = sshll.u32 [#allocation12], 4
      %s2180 = int_to_ptr.vmem [resolvable:$true] %s2179
      %2185 = dma.vmem_to_hbm [thread:$0]  %s2180, 256, %s7, [#allocation5], 32, 32, 2
    $region53: #{tpu_custom_call.1} parent=1 // pred_fallthru
      _
    // Predicated region
    $region54: #{tpu_custom_call.1} parent=1 // pred_check
      _
    $region55: #{tpu_custom_call.1} parent=1 // pred_check_branch
      %2187 = sbr.rel (0) target = $region57
    $region56: #{tpu_custom_call.1} parent=1 // pred_region
      %s2189 = ssub.s32 64, 64
      %2190 = vsyncadd [#allocation14], %s2189
      %s2191 = sshll.u32 [#allocation13], 4
      %s2192 = int_to_ptr.vmem [resolvable:$true] %s2191
      %2197 = dma.vmem_to_hbm [thread:$0]  %s2192, 64, %s8, [#allocation14], 32, 32, 2
    $region57: #{tpu_custom_call.1} parent=1 // pred_fallthru
      _
    // Predicated region
    $region58: #{tpu_custom_call.1} parent=1 // pred_check
      _
    $region59: #{tpu_custom_call.1} parent=1 // pred_check_branch
      %2199 = sbr.rel (0) target = $region61
    $region60: #{tpu_custom_call.1} parent=1 // pred_region
      %s2201 = ssub.s32 64, 64
      %2202 = vsyncadd [#allocation14], %s2201
      %s2203 = sshll.u32 [#allocation15], 4
      %s2204 = int_to_ptr.vmem [resolvable:$true] %s2203
      %2209 = dma.vmem_to_hbm [thread:$0]  %s2204, 64, %s9, [#allocation14], 32, 32, 2
    $region61: #{tpu_custom_call.1} parent=1 // pred_fallthru
      _
    // Predicated region
    $region62: #{tpu_custom_call.1} parent=1 // pred_check
      _
    $region63: #{tpu_custom_call.1} parent=1 // pred_check_branch
      %2211 = sbr.rel (0) target = $region65
    $region64: #{tpu_custom_call.1} parent=1 // pred_region
      %2212 = dma.done [#allocation5], 256
    $region65: #{tpu_custom_call.1} parent=1 // pred_fallthru
      _
    // Predicated region
    $region66: #{tpu_custom_call.1} parent=1 // pred_check
      _
    $region67: #{tpu_custom_call.1} parent=1 // pred_check_branch
      %2214 = sbr.rel (0) target = $region69
    $region68: #{tpu_custom_call.1} parent=1 // pred_region
      %2215 = dma.done [#allocation14], 64
    $region69: #{tpu_custom_call.1} parent=1 // pred_fallthru
      _
    // Predicated region
    $region70: #{tpu_custom_call.1} parent=1 // pred_check
      _
    $region71: #{tpu_custom_call.1} parent=1 // pred_check_branch
      %2217 = sbr.rel (0) target = $region73
    $region72: #{tpu_custom_call.1} parent=1 // pred_region
      %2218 = dma.done [#allocation14], 64
    $region73: #{tpu_custom_call.1} parent=1 // pred_fallthru
      _
    %2219 = vsyncpa [#allocation4], 1
    %2220 = vsyncpa [#allocation7], 1
    %2221 = vsyncpa [#allocation10], 1
    %2222 = vsyncpa [#allocation5], 1
    %2223 = vsyncpa [#allocation14], 1

</llo_original>
